<compile_context>
chip_gen: v7x
topology: tpu7x:2x2x1
jax: 0.10.0
libtpu: 0.0.40
codegen_flags: <defaults>
</compile_context>

<pallas_src>
import jax
import jax.numpy as jnp
from jax import lax
from jax.experimental import pallas as pl
from jax.experimental.pallas import tpu as pltpu


# ----------------------------- Pallas kernel ------------------------------- #

def fused_graphsage_kernel(x_ref,
                           msrc_ref, mdst_ref,          # message edges (adj)
                           w1l_ref, w1r_ref, b1_ref,
                           w2l_ref, w2r_ref, b2_ref,
                           wls_ref, wld_ref, blin_ref,
                           lsrc_ref, ldst_ref,          # label edges (gather)
                           o_ref):
    """Fused: adj build -> SAGEConv -> ReLU -> SAGEConv -> gather -> Linear."""
    f32 = jnp.float32
    x = x_ref[...]                                      # (N, F) node embeddings
    n = x_ref.shape[0]

    # ---- build mean-normalized dense adjacency from edge indices (in VMEM) --
    e_m = mdst_ref.shape[1]
    row_ids = lax.broadcasted_iota(jnp.int32, (n, e_m), 0)       # (N, E_m)
    oh_dst = (row_ids == mdst_ref[...]).astype(f32)              # (N, E_m)
    col_ids = lax.broadcasted_iota(jnp.int32, (e_m, n), 1)       # (E_m, N)
    oh_src_t = (col_ids == msrc_ref[...]).astype(f32)            # (E_m, N)

    adj = jnp.dot(oh_dst, oh_src_t, preferred_element_type=f32)  # (N, N) counts
    deg = oh_dst.sum(axis=1, keepdims=True)                      # (N, 1) in-deg
    inv_deg = 1.0 / jnp.maximum(deg, 1.0)                        # exact, reused

    # ---- layer 1 (reassociated: A @ (X @ W_l), normalize the (N, H) agg) ----
    h1 = jnp.dot(x, w1l_ref[...], preferred_element_type=f32)    # (N, H)
    agg1 = jnp.dot(adj, h1, preferred_element_type=f32) * inv_deg
    x1 = jnp.maximum(
        agg1 + jnp.dot(x, w1r_ref[...], preferred_element_type=f32) + b1_ref[...],
        0.0)                                                     # ReLU

    # ---- layer 2 ----
    h2 = jnp.dot(x1, w2l_ref[...], preferred_element_type=f32)   # (N, H)
    agg2 = jnp.dot(adj, h2, preferred_element_type=f32) * inv_deg
    x2 = (agg2 + jnp.dot(x1, w2r_ref[...], preferred_element_type=f32)
          + b2_ref[...])                                         # (N, H)

    # ---- link prediction head ----
    # concat([x2[src], x2[dst]], 1) @ W  ==  x2[src] @ W_s + x2[dst] @ W_d;
    # the per-edge gather is a one-hot select built from a 2-D iota so it runs
    # entirely in-kernel, writing a lane-dense (1, E_pad) row.
    p_s = jnp.dot(x2, wls_ref[...], preferred_element_type=f32)  # (N, 1)
    p_d = jnp.dot(x2, wld_ref[...], preferred_element_type=f32)  # (N, 1)

    e_l = o_ref.shape[1]
    node_ids = lax.broadcasted_iota(jnp.int32, (n, e_l), 0)      # (N, E_pad)
    sel_s = (node_ids == lsrc_ref[...]).astype(f32)
    sel_d = (node_ids == ldst_ref[...]).astype(f32)

    scores = (p_s * sel_s + p_d * sel_d).sum(axis=0, keepdims=True)  # (1, E_pad)
    o_ref[...] = (scores + blin_ref[...]).astype(o_ref.dtype)


# ------------------------------ wrappers ----------------------------------- #

_VMEM = pl.BlockSpec(memory_space=pltpu.MemorySpace.VMEM)


def _pad128(n):
    return max(((n + 127) // 128) * 128, 128)


def graphsage_forward(params, edge_index, edge_label_index, num_nodes):
    x = params["embedding"]
    n, f = x.shape
    h = params["w1_l"].shape[1]

    # Message-passing edges, lane-dense padded; pad index -1 matches no node.
    e_m = edge_index.shape[1]
    e_m_pad = _pad128(e_m)
    msrc = jnp.full((e_m_pad, 1), -1, jnp.int32).at[:e_m, 0].set(edge_index[0])
    mdst = jnp.full((1, e_m_pad), -1, jnp.int32).at[0, :e_m].set(edge_index[1])

    # Link-prediction (label) edges, lane-dense padded.
    e_l = edge_label_index.shape[1]
    e_l_pad = _pad128(e_l)
    lsrc = jnp.full((1, e_l_pad), -1, jnp.int32).at[0, :e_l].set(edge_label_index[0])
    ldst = jnp.full((1, e_l_pad), -1, jnp.int32).at[0, :e_l].set(edge_label_index[1])

    operands = (x,
                msrc, mdst,
                params["w1_l"], params["w1_r"], params["b1"],
                params["w2_l"], params["w2_r"], params["b2"],
                params["w_lin_src"], params["w_lin_dst"], params["b_lin"],
                lsrc, ldst)

    flops = (2 * n * n * e_m_pad                                  # adjacency
             + 2 * n * f * h + 2 * n * n * h + 2 * n * f * h      # layer 1
             + 2 * n * h * h + 2 * n * n * h + 2 * n * h * h      # layer 2
             + 2 * 2 * n * h + 4 * n * e_l_pad)                   # link head
    bytes_accessed = sum(int(o.size) * o.dtype.itemsize for o in operands) \
        + e_l_pad * 4

    out = pl.pallas_call(
        fused_graphsage_kernel,
        out_shape=jax.ShapeDtypeStruct((1, e_l_pad), jnp.float32),
        in_specs=[_VMEM] * len(operands),
        out_specs=_VMEM,
        compiler_params=pltpu.CompilerParams(
            vmem_limit_bytes=64 * 1024 * 1024),
        cost_estimate=pl.CostEstimate(
            flops=int(flops), transcendentals=0,
            bytes_accessed=int(bytes_accessed)),
    )(*operands)

    return out[0, :e_l]


# ----------------------------- pure-JAX reference --------------------------- #

def graphsage_reference(params, edge_index, edge_label_index, num_nodes):
    src, dst = edge_index[0], edge_index[1]
    adj = jnp.zeros((num_nodes, num_nodes), jnp.float32).at[dst, src].add(1.0)
    deg = adj.sum(axis=1, keepdims=True)
    a_norm = adj / jnp.maximum(deg, 1.0)

    x = params["embedding"]
    x = jnp.maximum(a_norm @ x @ params["w1_l"] + x @ params["w1_r"]
                    + params["b1"], 0.0)
    x = a_norm @ x @ params["w2_l"] + x @ params["w2_r"] + params["b2"]
    s, d = edge_label_index[0], edge_label_index[1]
    emb = jnp.concatenate([x[s], x[d]], axis=1)
    w = jnp.concatenate([params["w_lin_src"], params["w_lin_dst"]], axis=0)
    return (emb @ w + params["b_lin"]).reshape(-1)


# --------------------------------- main ------------------------------------ #

if __name__ == "__main__":
    NUM_NODES = 64
    EMBED_DIM = 32
    HIDDEN_DIM = 32
    NUM_EDGES = 128
    NUM_LABEL_EDGES = 16

    key = jax.random.PRNGKey(0)
    keys = jax.random.split(key, 11)

    # Deterministic synthetic parameters (shapes match the PyTorch module).
    params = {
        "embedding": jax.random.normal(keys[0], (NUM_NODES, EMBED_DIM), jnp.float32),
        # SAGEConv(embed_dim, hidden_dim): lin_l (neighbors, w/ bias), lin_r (self)
        "w1_l": jax.random.normal(keys[1], (EMBED_DIM, HIDDEN_DIM), jnp.float32) * 0.1,
        "w1_r": jax.random.normal(keys[2], (EMBED_DIM, HIDDEN_DIM), jnp.float32) * 0.1,
        "b1": jax.random.normal(keys[3], (1, HIDDEN_DIM), jnp.float32) * 0.1,
        # SAGEConv(hidden_dim, hidden_dim)
        "w2_l": jax.random.normal(keys[4], (HIDDEN_DIM, HIDDEN_DIM), jnp.float32) * 0.1,
        "w2_r": jax.random.normal(keys[5], (HIDDEN_DIM, HIDDEN_DIM), jnp.float32) * 0.1,
        "b2": jax.random.normal(keys[6], (1, HIDDEN_DIM), jnp.float32) * 0.1,
        # Linear(hidden_dim * 2, 1), weight split into [src-half, dst-half]
        "w_lin_src": jax.random.normal(keys[7], (HIDDEN_DIM, 1), jnp.float32) * 0.1,
        "w_lin_dst": jax.random.normal(keys[8], (HIDDEN_DIM, 1), jnp.float32) * 0.1,
        "b_lin": jax.random.normal(keys[9], (1, 1), jnp.float32) * 0.1,
    }

    ek = jax.random.split(keys[10], 2)
    edge_index = jax.random.randint(ek[0], (2, NUM_EDGES), 0, NUM_NODES, jnp.int32)
    edge_label_index = jax.random.randint(ek[1], (2, NUM_LABEL_EDGES), 0,
                                          NUM_NODES, jnp.int32)

    out = graphsage_forward(params, edge_index, edge_label_index, NUM_NODES)
    out = jax.block_until_ready(out)

    ref = graphsage_reference(params, edge_index, edge_label_index, NUM_NODES)
    assert out.shape == (NUM_LABEL_EDGES,)
    assert jnp.allclose(out, ref, atol=1e-4, rtol=1e-4), (out, ref)

    print("KERNEL_OK")
</pallas_src>

<mosaic_0001>
module attributes {stable_mosaic.version = 11 : i64} {
  func.func @fused_graphsage_kernel(%arg0: memref<64x32xf32, #tpu.memory_space<vmem>>, %arg1: memref<128x1xi32, #tpu.memory_space<vmem>>, %arg2: memref<1x128xi32, #tpu.memory_space<vmem>>, %arg3: memref<32x32xf32, #tpu.memory_space<vmem>>, %arg4: memref<32x32xf32, #tpu.memory_space<vmem>>, %arg5: memref<1x32xf32, #tpu.memory_space<vmem>>, %arg6: memref<32x32xf32, #tpu.memory_space<vmem>>, %arg7: memref<32x32xf32, #tpu.memory_space<vmem>>, %arg8: memref<1x32xf32, #tpu.memory_space<vmem>>, %arg9: memref<32x1xf32, #tpu.memory_space<vmem>>, %arg10: memref<32x1xf32, #tpu.memory_space<vmem>>, %arg11: memref<1x1xf32, #tpu.memory_space<vmem>>, %arg12: memref<1x128xi32, #tpu.memory_space<vmem>>, %arg13: memref<1x128xi32, #tpu.memory_space<vmem>>, %arg14: memref<1x128xf32, #tpu.memory_space<vmem>>) attributes {dimension_semantics = [], scalar_prefetch = 0 : i64, scratch_operands = 0 : i64, tpu.core_type = #tpu.core_type<tc>} {
    %c0 = arith.constant 0 : index
    %c0_0 = arith.constant 0 : index
    %0 = vector.load %arg0[%c0, %c0_0] : memref<64x32xf32, #tpu.memory_space<vmem>>, vector<64x32xf32>
    %1 = tpu.iota {dimensions = array<i32: 0>} : vector<64x128xi32>
    %c0_1 = arith.constant 0 : index
    %c0_2 = arith.constant 0 : index
    %2 = vector.load %arg2[%c0_1, %c0_2] : memref<1x128xi32, #tpu.memory_space<vmem>>, vector<1x128xi32>
    %3 = vector.broadcast %2 : vector<1x128xi32> to vector<64x128xi32>
    %4 = arith.cmpi eq, %1, %3 : vector<64x128xi32>
    %5 = arith.extui %4 : vector<64x128xi1> to vector<64x128xi32>
    %6 = arith.sitofp %5 : vector<64x128xi32> to vector<64x128xf32>
    %7 = tpu.iota {dimensions = array<i32: 1>} : vector<128x64xi32>
    %c0_3 = arith.constant 0 : index
    %c0_4 = arith.constant 0 : index
    %8 = vector.load %arg1[%c0_3, %c0_4] : memref<128x1xi32, #tpu.memory_space<vmem>>, vector<128x1xi32>
    %9 = vector.broadcast %8 : vector<128x1xi32> to vector<128x64xi32>
    %10 = arith.cmpi eq, %7, %9 : vector<128x64xi32>
    %11 = arith.extui %10 : vector<128x64xi1> to vector<128x64xi32>
    %12 = arith.sitofp %11 : vector<128x64xi32> to vector<128x64xf32>
    %cst = arith.constant dense<0.000000e+00> : vector<64x64xf32>
    %13 = tpu.matmul %6, %12, %cst {dimension_numbers = #tpu.dot_dimension_numbers<[1], [0], [0], [1], [0, 0, 1, 1], [], []>} : vector<64x128xf32>, vector<128x64xf32>, vector<64x64xf32> -> vector<64x64xf32>
    %cst_5 = arith.constant dense<0.000000e+00> : vector<64xf32>
    %14 = vector.multi_reduction <add>, %6, %cst_5 [1] : vector<64x128xf32> to vector<64xf32>
    %15 = vector.shape_cast %14 : vector<64xf32> to vector<64x1xf32>
    %cst_6 = arith.constant 1.000000e+00 : f32
    %16 = vector.broadcast %cst_6 : f32 to vector<64x1xf32>
    %17 = arith.maximumf %15, %16 : vector<64x1xf32>
    %cst_7 = arith.constant 1.000000e+00 : f32
    %18 = vector.broadcast %cst_7 : f32 to vector<64x1xf32>
    %19 = arith.divf %18, %17 : vector<64x1xf32>
    %c0_8 = arith.constant 0 : index
    %c0_9 = arith.constant 0 : index
    %20 = vector.load %arg3[%c0_8, %c0_9] : memref<32x32xf32, #tpu.memory_space<vmem>>, vector<32x32xf32>
    %cst_10 = arith.constant dense<0.000000e+00> : vector<64x32xf32>
    %21 = tpu.matmul %0, %20, %cst_10 {dimension_numbers = #tpu.dot_dimension_numbers<[1], [0], [0], [1], [0, 0, 1, 1], [], []>} : vector<64x32xf32>, vector<32x32xf32>, vector<64x32xf32> -> vector<64x32xf32>
    %cst_11 = arith.constant dense<0.000000e+00> : vector<64x32xf32>
    %22 = tpu.matmul %13, %21, %cst_11 {dimension_numbers = #tpu.dot_dimension_numbers<[1], [0], [0], [1], [0, 0, 1, 1], [], []>} : vector<64x64xf32>, vector<64x32xf32>, vector<64x32xf32> -> vector<64x32xf32>
    %23 = vector.broadcast %19 : vector<64x1xf32> to vector<64x32xf32>
    %24 = arith.mulf %22, %23 : vector<64x32xf32>
    %c0_12 = arith.constant 0 : index
    %c0_13 = arith.constant 0 : index
    %25 = vector.load %arg4[%c0_12, %c0_13] : memref<32x32xf32, #tpu.memory_space<vmem>>, vector<32x32xf32>
    %cst_14 = arith.constant dense<0.000000e+00> : vector<64x32xf32>
    %26 = tpu.matmul %0, %25, %cst_14 {dimension_numbers = #tpu.dot_dimension_numbers<[1], [0], [0], [1], [0, 0, 1, 1], [], []>} : vector<64x32xf32>, vector<32x32xf32>, vector<64x32xf32> -> vector<64x32xf32>
    %27 = arith.addf %24, %26 : vector<64x32xf32>
    %c0_15 = arith.constant 0 : index
    %c0_16 = arith.constant 0 : index
    %28 = vector.load %arg5[%c0_15, %c0_16] : memref<1x32xf32, #tpu.memory_space<vmem>>, vector<1x32xf32>
    %29 = vector.broadcast %28 : vector<1x32xf32> to vector<64x32xf32>
    %30 = arith.addf %27, %29 : vector<64x32xf32>
    %cst_17 = arith.constant 0.000000e+00 : f32
    %31 = vector.broadcast %cst_17 : f32 to vector<64x32xf32>
    %32 = arith.maximumf %30, %31 : vector<64x32xf32>
    %c0_18 = arith.constant 0 : index
    %c0_19 = arith.constant 0 : index
    %33 = vector.load %arg6[%c0_18, %c0_19] : memref<32x32xf32, #tpu.memory_space<vmem>>, vector<32x32xf32>
    %cst_20 = arith.constant dense<0.000000e+00> : vector<64x32xf32>
    %34 = tpu.matmul %32, %33, %cst_20 {dimension_numbers = #tpu.dot_dimension_numbers<[1], [0], [0], [1], [0, 0, 1, 1], [], []>} : vector<64x32xf32>, vector<32x32xf32>, vector<64x32xf32> -> vector<64x32xf32>
    %cst_21 = arith.constant dense<0.000000e+00> : vector<64x32xf32>
    %35 = tpu.matmul %13, %34, %cst_21 {dimension_numbers = #tpu.dot_dimension_numbers<[1], [0], [0], [1], [0, 0, 1, 1], [], []>} : vector<64x64xf32>, vector<64x32xf32>, vector<64x32xf32> -> vector<64x32xf32>
    %36 = vector.broadcast %19 : vector<64x1xf32> to vector<64x32xf32>
    %37 = arith.mulf %35, %36 : vector<64x32xf32>
    %c0_22 = arith.constant 0 : index
    %c0_23 = arith.constant 0 : index
    %38 = vector.load %arg7[%c0_22, %c0_23] : memref<32x32xf32, #tpu.memory_space<vmem>>, vector<32x32xf32>
    %cst_24 = arith.constant dense<0.000000e+00> : vector<64x32xf32>
    %39 = tpu.matmul %32, %38, %cst_24 {dimension_numbers = #tpu.dot_dimension_numbers<[1], [0], [0], [1], [0, 0, 1, 1], [], []>} : vector<64x32xf32>, vector<32x32xf32>, vector<64x32xf32> -> vector<64x32xf32>
    %40 = arith.addf %37, %39 : vector<64x32xf32>
    %c0_25 = arith.constant 0 : index
    %c0_26 = arith.constant 0 : index
    %41 = vector.load %arg8[%c0_25, %c0_26] : memref<1x32xf32, #tpu.memory_space<vmem>>, vector<1x32xf32>
    %42 = vector.broadcast %41 : vector<1x32xf32> to vector<64x32xf32>
    %43 = arith.addf %40, %42 : vector<64x32xf32>
    %c0_27 = arith.constant 0 : index
    %c0_28 = arith.constant 0 : index
    %44 = vector.load %arg9[%c0_27, %c0_28] : memref<32x1xf32, #tpu.memory_space<vmem>>, vector<32x1xf32>
    %cst_29 = arith.constant dense<0.000000e+00> : vector<64x1xf32>
    %45 = tpu.matmul %43, %44, %cst_29 {dimension_numbers = #tpu.dot_dimension_numbers<[1], [0], [0], [1], [0, 0, 1, 1], [], []>} : vector<64x32xf32>, vector<32x1xf32>, vector<64x1xf32> -> vector<64x1xf32>
    %c0_30 = arith.constant 0 : index
    %c0_31 = arith.constant 0 : index
    %46 = vector.load %arg10[%c0_30, %c0_31] : memref<32x1xf32, #tpu.memory_space<vmem>>, vector<32x1xf32>
    %cst_32 = arith.constant dense<0.000000e+00> : vector<64x1xf32>
    %47 = tpu.matmul %43, %46, %cst_32 {dimension_numbers = #tpu.dot_dimension_numbers<[1], [0], [0], [1], [0, 0, 1, 1], [], []>} : vector<64x32xf32>, vector<32x1xf32>, vector<64x1xf32> -> vector<64x1xf32>
    %48 = tpu.iota {dimensions = array<i32: 0>} : vector<64x128xi32>
    %c0_33 = arith.constant 0 : index
    %c0_34 = arith.constant 0 : index
    %49 = vector.load %arg12[%c0_33, %c0_34] : memref<1x128xi32, #tpu.memory_space<vmem>>, vector<1x128xi32>
    %50 = vector.broadcast %49 : vector<1x128xi32> to vector<64x128xi32>
    %51 = arith.cmpi eq, %48, %50 : vector<64x128xi32>
    %52 = arith.extui %51 : vector<64x128xi1> to vector<64x128xi32>
    %53 = arith.sitofp %52 : vector<64x128xi32> to vector<64x128xf32>
    %c0_35 = arith.constant 0 : index
    %c0_36 = arith.constant 0 : index
    %54 = vector.load %arg13[%c0_35, %c0_36] : memref<1x128xi32, #tpu.memory_space<vmem>>, vector<1x128xi32>
    %55 = vector.broadcast %54 : vector<1x128xi32> to vector<64x128xi32>
    %56 = arith.cmpi eq, %48, %55 : vector<64x128xi32>
    %57 = arith.extui %56 : vector<64x128xi1> to vector<64x128xi32>
    %58 = arith.sitofp %57 : vector<64x128xi32> to vector<64x128xf32>
    %59 = vector.broadcast %45 : vector<64x1xf32> to vector<64x128xf32>
    %60 = arith.mulf %59, %53 : vector<64x128xf32>
    %61 = vector.broadcast %47 : vector<64x1xf32> to vector<64x128xf32>
    %62 = arith.mulf %61, %58 : vector<64x128xf32>
    %63 = arith.addf %60, %62 : vector<64x128xf32>
    %cst_37 = arith.constant dense<0.000000e+00> : vector<128xf32>
    %64 = vector.multi_reduction <add>, %63, %cst_37 [0] : vector<64x128xf32> to vector<128xf32>
    %65 = vector.shape_cast %64 : vector<128xf32> to vector<1x128xf32>
    %c0_38 = arith.constant 0 : index
    %c0_39 = arith.constant 0 : index
    %66 = vector.load %arg11[%c0_38, %c0_39] : memref<1x1xf32, #tpu.memory_space<vmem>>, vector<1x1xf32>
    %67 = vector.broadcast %66 : vector<1x1xf32> to vector<1x128xf32>
    %68 = arith.addf %65, %67 : vector<1x128xf32>
    %c0_40 = arith.constant 0 : index
    %c0_41 = arith.constant 0 : index
    %69 = vector.load %arg14[%c0_40, %c0_41] : memref<1x128xf32, #tpu.memory_space<vmem>>, vector<1x128xf32>
    tpu.vector_store %arg14[%c0_40, %c0_41], %68 {strides = array<i32>} : memref<1x128xf32, #tpu.memory_space<vmem>>, vector<1x128xf32>,
    return
  }
}

</mosaic_0001>

<llo_original>
// kernel: tpu_custom_call.1
$region0: #{tpu_custom_call.1}
  #allocation0 [shape = 'u32[]', space=smem, size = 0x4, offset = 0x4, fixed_abs, tag = 'smem constant byte address 0x4 - core index']
  #allocation1 [shape = 'u32[144,128]{1,0:T(1,128)}', space=vmem, size = 0x12000, scoped, tag = 'internal scratch']
  #allocation2 [shape = 'f32[1,1]{1,0:T(1,128)S(1)}', space=vmem, size = 0x200, scoped, tag = 'scoped memory for tpu_custom_call.1']
  %s0 = inlined_call_operand.hbm [shape: f32[64,32], index: 0, kind: input, shape index: {}]
  %s1 = inlined_call_operand.hbm [shape: s32[128,1], index: 1, kind: input, shape index: {}]
  %s2 = inlined_call_operand.hbm [shape: s32[1,128], index: 2, kind: input, shape index: {}]
  %s3 = inlined_call_operand.hbm [shape: f32[32,32], index: 3, kind: input, shape index: {}]
  %s4 = inlined_call_operand.hbm [shape: f32[32,32], index: 4, kind: input, shape index: {}]
  %s5 = inlined_call_operand.hbm [shape: f32[1,32], index: 5, kind: input, shape index: {}]
  %s6 = inlined_call_operand.hbm [shape: f32[32,32], index: 6, kind: input, shape index: {}]
  %s7 = inlined_call_operand.hbm [shape: f32[32,32], index: 7, kind: input, shape index: {}]
  %s8 = inlined_call_operand.hbm [shape: f32[1,32], index: 8, kind: input, shape index: {}]
  %s9 = inlined_call_operand.hbm [shape: f32[32,1], index: 9, kind: input, shape index: {}]
  %s10 = inlined_call_operand.hbm [shape: f32[32,1], index: 10, kind: input, shape index: {}]
  %s11 = inlined_call_operand.<no memory space> [shape: f32[1,1], index: 11, kind: input, shape index: {}]
  %s12 = inlined_call_operand.hbm [shape: s32[1,128], index: 12, kind: input, shape index: {}]
  %s13 = inlined_call_operand.hbm [shape: s32[1,128], index: 13, kind: input, shape index: {}]
  %s14 = inlined_call_operand.hbm [shape: f32[1,128], index: 14, kind: output, shape index: {}]
  %s15 = sld [smem:[#allocation0]]
  $region118: #{tpu_custom_call.1} parent=0
    _
  %s17 = ssub.s32 1, %s15
  %s18 = scalar_select 0, %s17, %s15
  %v19 = vstv %s11
  %20 = vst [vmem:[#allocation2] sm:$0x1] %v19
  $region1: #{tpu_custom_call.1} parent=0
    #allocation3 [shape = 'u8[32768]{0}', space=vmem, size = 0x8000, scoped, tag = 'input window, operand 0, single buffered']
    #allocation4 [shape = 's32[1]{0}', space=sflag, size = 0x4, scoped, tag = 'scoped memory for tpu_custom_call.1']
    #allocation5 [shape = 's32[1]{0}', space=sflag, size = 0x4, scoped, tag = 'scoped memory for tpu_custom_call.1']
    #allocation6 [shape = 'u8[65536]{0}', space=vmem, size = 0x10000, scoped, tag = 'input window, operand 1, single buffered']
    #allocation7 [shape = 's32[1]{0}', space=sflag, size = 0x4, scoped, tag = 'scoped memory for tpu_custom_call.1']
    #allocation8 [shape = 'u8[512]{0}', space=vmem, size = 0x400, scoped, tag = 'input window, operand 2, single buffered']
    #allocation9 [shape = 'u8[16384]{0}', space=vmem, size = 0x4000, scoped, tag = 'input window, operand 3, single buffered']
    #allocation10 [shape = 's32[1]{0}', space=sflag, size = 0x4, scoped, tag = 'scoped memory for tpu_custom_call.1']
    #allocation11 [shape = 'u8[16384]{0}', space=vmem, size = 0x4000, scoped, tag = 'input window, operand 4, single buffered']
    #allocation12 [shape = 'u8[512]{0}', space=vmem, size = 0x400, scoped, tag = 'input window, operand 5, single buffered']
    #allocation13 [shape = 's32[1]{0}', space=sflag, size = 0x4, scoped, tag = 'scoped memory for tpu_custom_call.1']
    #allocation14 [shape = 'u8[16384]{0}', space=vmem, size = 0x4000, scoped, tag = 'input window, operand 6, single buffered']
    #allocation15 [shape = 'u8[16384]{0}', space=vmem, size = 0x4000, scoped, tag = 'input window, operand 7, single buffered']
    #allocation16 [shape = 's32[1]{0}', space=sflag, size = 0x4, scoped, tag = 'scoped memory for tpu_custom_call.1']
    #allocation17 [shape = 'u8[512]{0}', space=vmem, size = 0x400, scoped, tag = 'input window, operand 8, single buffered']
    #allocation18 [shape = 'u8[16384]{0}', space=vmem, size = 0x4000, scoped, tag = 'input window, operand 9, single buffered']
    #allocation19 [shape = 's32[1]{0}', space=sflag, size = 0x4, scoped, tag = 'scoped memory for tpu_custom_call.1']
    #allocation20 [shape = 'u8[16384]{0}', space=vmem, size = 0x4000, scoped, tag = 'input window, operand 10, single buffered']
    #allocation21 [shape = 'u8[512]{0}', space=vmem, size = 0x400, scoped, tag = 'input window, operand 12, single buffered']
    #allocation22 [shape = 's32[1]{0}', space=sflag, size = 0x4, scoped, tag = 'scoped memory for tpu_custom_call.1']
    #allocation23 [shape = 'u8[512]{0}', space=vmem, size = 0x400, scoped, tag = 'input window, operand 13, single buffered']
    #allocation24 [shape = 'u8[512]{0}', space=vmem, size = 0x400, scoped, tag = 'output window, operand 0, single buffered']
    %21 = vsyncpa [#allocation4], 0
    %22 = vsyncpa [#allocation7], 0
    %23 = vsyncpa [#allocation10], 0
    %24 = vsyncpa [#allocation13], 0
    %25 = vsyncpa [#allocation16], 0
    %26 = vsyncpa [#allocation19], 0
    %27 = vsyncpa [#allocation22], 0
    %28 = vsyncpa [#allocation5], 0
    // Predicated region
    $region2: #{tpu_custom_call.1} parent=1 // pred_check
      _
    $region3: #{tpu_custom_call.1} parent=1 // pred_check_branch
      %30 = sbr.rel (0) target = $region5
    $region4: #{tpu_custom_call.1} parent=1 // pred_region
      %s32 = ssub.s32 1024, 1024
      %33 = vsyncadd [#allocation4], %s32
      %s34 = sshll.u32 [#allocation3], 4
      %s35 = int_to_ptr.vmem [resolvable:$true] %s34
      %40 = dma.hbm_to_vmem [thread:$0]  %s0, 1024, %s35, [#allocation4], 128, 128, 8
    $region5: #{tpu_custom_call.1} parent=1 // pred_fallthru
      _
    // Predicated region
    $region6: #{tpu_custom_call.1} parent=1 // pred_check
      _
    $region7: #{tpu_custom_call.1} parent=1 // pred_check_branch
      %42 = sbr.rel (0) target = $region9
    $region8: #{tpu_custom_call.1} parent=1 // pred_region
      %s44 = ssub.s32 2048, 2048
      %45 = vsyncadd [#allocation7], %s44
      %s46 = sshll.u32 [#allocation6], 4
      %s47 = int_to_ptr.vmem [resolvable:$true] %s46
      %52 = dma.hbm_to_vmem [thread:$0]  %s1, 2048, %s47, [#allocation7], 128, 128, 8
    $region9: #{tpu_custom_call.1} parent=1 // pred_fallthru
      _
    // Predicated region
    $region10: #{tpu_custom_call.1} parent=1 // pred_check
      _
    $region11: #{tpu_custom_call.1} parent=1 // pred_check_branch
      %54 = sbr.rel (0) target = $region13
    $region12: #{tpu_custom_call.1} parent=1 // pred_region
      %s56 = ssub.s32 16, 16
      %57 = vsyncadd [#allocation7], %s56
      %s59 = sshll.u32 [#allocation8], 4
      %s60 = int_to_ptr.vmem [resolvable:$true] %s59
      %62 = dma.hbm_to_vmem [thread:$0]  %s2, 16, %s60, [#allocation7]
    $region13: #{tpu_custom_call.1} parent=1 // pred_fallthru
      _
    // Predicated region
    $region14: #{tpu_custom_call.1} parent=1 // pred_check
      _
    $region15: #{tpu_custom_call.1} parent=1 // pred_check_branch
      %64 = sbr.rel (0) target = $region17
    $region16: #{tpu_custom_call.1} parent=1 // pred_region
      %s66 = ssub.s32 512, 512
      %67 = vsyncadd [#allocation10], %s66
      %s68 = sshll.u32 [#allocation9], 4
      %s69 = int_to_ptr.vmem [resolvable:$true] %s68
      %74 = dma.hbm_to_vmem [thread:$0]  %s3, 512, %s69, [#allocation10], 128, 128, 8
    $region17: #{tpu_custom_call.1} parent=1 // pred_fallthru
      _
    // Predicated region
    $region18: #{tpu_custom_call.1} parent=1 // pred_check
      _
    $region19: #{tpu_custom_call.1} parent=1 // pred_check_branch
      %76 = sbr.rel (0) target = $region21
    $region20: #{tpu_custom_call.1} parent=1 // pred_region
      %s78 = ssub.s32 512, 512
      %79 = vsyncadd [#allocation10], %s78
      %s80 = sshll.u32 [#allocation11], 4
      %s81 = int_to_ptr.vmem [resolvable:$true] %s80
      %86 = dma.hbm_to_vmem [thread:$0]  %s4, 512, %s81, [#allocation10], 128, 128, 8
    $region21: #{tpu_custom_call.1} parent=1 // pred_fallthru
      _
    // Predicated region
    $region22: #{tpu_custom_call.1} parent=1 // pred_check
      _
    $region23: #{tpu_custom_call.1} parent=1 // pred_check_branch
      %88 = sbr.rel (0) target = $region25
    $region24: #{tpu_custom_call.1} parent=1 // pred_region
      %s90 = ssub.s32 16, 16
      %91 = vsyncadd [#allocation13], %s90
      %s93 = sshll.u32 [#allocation12], 4
      %s94 = int_to_ptr.vmem [resolvable:$true] %s93
      %96 = dma.hbm_to_vmem [thread:$0]  %s5, 16, %s94, [#allocation13]
    $region25: #{tpu_custom_call.1} parent=1 // pred_fallthru
      _
    // Predicated region
    $region26: #{tpu_custom_call.1} parent=1 // pred_check
      _
    $region27: #{tpu_custom_call.1} parent=1 // pred_check_branch
      %98 = sbr.rel (0) target = $region29
    $region28: #{tpu_custom_call.1} parent=1 // pred_region
      %s100 = ssub.s32 512, 512
      %101 = vsyncadd [#allocation13], %s100
      %s102 = sshll.u32 [#allocation14], 4
      %s103 = int_to_ptr.vmem [resolvable:$true] %s102
      %108 = dma.hbm_to_vmem [thread:$0]  %s6, 512, %s103, [#allocation13], 128, 128, 8
    $region29: #{tpu_custom_call.1} parent=1 // pred_fallthru
      _
    // Predicated region
    $region30: #{tpu_custom_call.1} parent=1 // pred_check
      _
    $region31: #{tpu_custom_call.1} parent=1 // pred_check_branch
      %110 = sbr.rel (0) target = $region33
    $region32: #{tpu_custom_call.1} parent=1 // pred_region
      %s112 = ssub.s32 512, 512
      %113 = vsyncadd [#allocation16], %s112
      %s114 = sshll.u32 [#allocation15], 4
      %s115 = int_to_ptr.vmem [resolvable:$true] %s114
      %120 = dma.hbm_to_vmem [thread:$0]  %s7, 512, %s115, [#allocation16], 128, 128, 8
    $region33: #{tpu_custom_call.1} parent=1 // pred_fallthru
      _
    // Predicated region
    $region34: #{tpu_custom_call.1} parent=1 // pred_check
      _
    $region35: #{tpu_custom_call.1} parent=1 // pred_check_branch
      %122 = sbr.rel (0) target = $region37
    $region36: #{tpu_custom_call.1} parent=1 // pred_region
      %s124 = ssub.s32 16, 16
      %125 = vsyncadd [#allocation16], %s124
      %s127 = sshll.u32 [#allocation17], 4
      %s128 = int_to_ptr.vmem [resolvable:$true] %s127
      %130 = dma.hbm_to_vmem [thread:$0]  %s8, 16, %s128, [#allocation16]
    $region37: #{tpu_custom_call.1} parent=1 // pred_fallthru
      _
    // Predicated region
    $region38: #{tpu_custom_call.1} parent=1 // pred_check
      _
    $region39: #{tpu_custom_call.1} parent=1 // pred_check_branch
      %132 = sbr.rel (0) target = $region41
    $region40: #{tpu_custom_call.1} parent=1 // pred_region
      %s134 = ssub.s32 512, 512
      %135 = vsyncadd [#allocation19], %s134
      %s136 = sshll.u32 [#allocation18], 4
      %s137 = int_to_ptr.vmem [resolvable:$true] %s136
      %142 = dma.hbm_to_vmem [thread:$0]  %s9, 512, %s137, [#allocation19], 128, 128, 8
    $region41: #{tpu_custom_call.1} parent=1 // pred_fallthru
      _
    // Predicated region
    $region42: #{tpu_custom_call.1} parent=1 // pred_check
      _
    $region43: #{tpu_custom_call.1} parent=1 // pred_check_branch
      %144 = sbr.rel (0) target = $region45
    $region44: #{tpu_custom_call.1} parent=1 // pred_region
      %s146 = ssub.s32 512, 512
      %147 = vsyncadd [#allocation19], %s146
      %s148 = sshll.u32 [#allocation20], 4
      %s149 = int_to_ptr.vmem [resolvable:$true] %s148
      %154 = dma.hbm_to_vmem [thread:$0]  %s10, 512, %s149, [#allocation19], 128, 128, 8
    $region45: #{tpu_custom_call.1} parent=1 // pred_fallthru
      _
    // Predicated region
    $region46: #{tpu_custom_call.1} parent=1 // pred_check
      _
    $region47: #{tpu_custom_call.1} parent=1 // pred_check_branch
      %156 = sbr.rel (0) target = $region49
    $region48: #{tpu_custom_call.1} parent=1 // pred_region
      _
    $region49: #{tpu_custom_call.1} parent=1 // pred_fallthru
      _
    // Predicated region
    $region50: #{tpu_custom_call.1} parent=1 // pred_check
      _
    $region51: #{tpu_custom_call.1} parent=1 // pred_check_branch
      %158 = sbr.rel (0) target = $region53
    $region52: #{tpu_custom_call.1} parent=1 // pred_region
      %s160 = ssub.s32 16, 16
      %161 = vsyncadd [#allocation22], %s160
      %s163 = sshll.u32 [#allocation21], 4
      %s164 = int_to_ptr.vmem [resolvable:$true] %s163
      %166 = dma.hbm_to_vmem [thread:$0]  %s12, 16, %s164, [#allocation22]
    $region53: #{tpu_custom_call.1} parent=1 // pred_fallthru
      _
    // Predicated region
    $region54: #{tpu_custom_call.1} parent=1 // pred_check
      _
    $region55: #{tpu_custom_call.1} parent=1 // pred_check_branch
      %168 = sbr.rel (0) target = $region57
    $region56: #{tpu_custom_call.1} parent=1 // pred_region
      %s170 = ssub.s32 16, 16
      %171 = vsyncadd [#allocation22], %s170
      %s173 = sshll.u32 [#allocation23], 4
      %s174 = int_to_ptr.vmem [resolvable:$true] %s173
      %176 = dma.hbm_to_vmem [thread:$0]  %s13, 16, %s174, [#allocation22]
    $region57: #{tpu_custom_call.1} parent=1 // pred_fallthru
      _
    // Predicated region
    $region58: #{tpu_custom_call.1} parent=1 // pred_check
      _
    $region59: #{tpu_custom_call.1} parent=1 // pred_check_branch
      %178 = sbr.rel (0) target = $region61
    $region60: #{tpu_custom_call.1} parent=1 // pred_region
      %179 = dma.done [#allocation4], 1024
    $region61: #{tpu_custom_call.1} parent=1 // pred_fallthru
      _
    // Predicated region
    $region62: #{tpu_custom_call.1} parent=1 // pred_check
      _
    $region63: #{tpu_custom_call.1} parent=1 // pred_check_branch
      %181 = sbr.rel (0) target = $region65
    $region64: #{tpu_custom_call.1} parent=1 // pred_region
      %182 = dma.done [#allocation7], 2048
    $region65: #{tpu_custom_call.1} parent=1 // pred_fallthru
      _
    // Predicated region
    $region66: #{tpu_custom_call.1} parent=1 // pred_check
      _
    $region67: #{tpu_custom_call.1} parent=1 // pred_check_branch
      %184 = sbr.rel (0) target = $region69
    $region68: #{tpu_custom_call.1} parent=1 // pred_region
      %185 = dma.done [#allocation7], 16
    $region69: #{tpu_custom_call.1} parent=1 // pred_fallthru
      _
    // Predicated region
    $region70: #{tpu_custom_call.1} parent=1 // pred_check
      _
    $region71: #{tpu_custom_call.1} parent=1 // pred_check_branch
      %187 = sbr.rel (0) target = $region73
    $region72: #{tpu_custom_call.1} parent=1 // pred_region
      %188 = dma.done [#allocation10], 512
    $region73: #{tpu_custom_call.1} parent=1 // pred_fallthru
      _
    // Predicated region
    $region74: #{tpu_custom_call.1} parent=1 // pred_check
      _
    $region75: #{tpu_custom_call.1} parent=1 // pred_check_branch
      %190 = sbr.rel (0) target = $region77
    $region76: #{tpu_custom_call.1} parent=1 // pred_region
      %191 = dma.done [#allocation10], 512
    $region77: #{tpu_custom_call.1} parent=1 // pred_fallthru
      _
    // Predicated region
    $region78: #{tpu_custom_call.1} parent=1 // pred_check
      _
    $region79: #{tpu_custom_call.1} parent=1 // pred_check_branch
      %193 = sbr.rel (0) target = $region81
    $region80: #{tpu_custom_call.1} parent=1 // pred_region
      %194 = dma.done [#allocation13], 16
    $region81: #{tpu_custom_call.1} parent=1 // pred_fallthru
      _
    // Predicated region
    $region82: #{tpu_custom_call.1} parent=1 // pred_check
      _
    $region83: #{tpu_custom_call.1} parent=1 // pred_check_branch
      %196 = sbr.rel (0) target = $region85
    $region84: #{tpu_custom_call.1} parent=1 // pred_region
      %197 = dma.done [#allocation13], 512
    $region85: #{tpu_custom_call.1} parent=1 // pred_fallthru
      _
    // Predicated region
    $region86: #{tpu_custom_call.1} parent=1 // pred_check
      _
    $region87: #{tpu_custom_call.1} parent=1 // pred_check_branch
      %199 = sbr.rel (0) target = $region89
    $region88: #{tpu_custom_call.1} parent=1 // pred_region
      %200 = dma.done [#allocation16], 512
    $region89: #{tpu_custom_call.1} parent=1 // pred_fallthru
      _
    // Predicated region
    $region90: #{tpu_custom_call.1} parent=1 // pred_check
      _
    $region91: #{tpu_custom_call.1} parent=1 // pred_check_branch
      %202 = sbr.rel (0) target = $region93
    $region92: #{tpu_custom_call.1} parent=1 // pred_region
      %203 = dma.done [#allocation16], 16
    $region93: #{tpu_custom_call.1} parent=1 // pred_fallthru
      _
    // Predicated region
    $region94: #{tpu_custom_call.1} parent=1 // pred_check
      _
    $region95: #{tpu_custom_call.1} parent=1 // pred_check_branch
      %205 = sbr.rel (0) target = $region97
    $region96: #{tpu_custom_call.1} parent=1 // pred_region
      %206 = dma.done [#allocation19], 512
    $region97: #{tpu_custom_call.1} parent=1 // pred_fallthru
      _
    // Predicated region
    $region98: #{tpu_custom_call.1} parent=1 // pred_check
      _
    $region99: #{tpu_custom_call.1} parent=1 // pred_check_branch
      %208 = sbr.rel (0) target = $region101
    $region100: #{tpu_custom_call.1} parent=1 // pred_region
      %209 = dma.done [#allocation19], 512
    $region101: #{tpu_custom_call.1} parent=1 // pred_fallthru
      _
    // Predicated region
    $region102: #{tpu_custom_call.1} parent=1 // pred_check
      _
    $region103: #{tpu_custom_call.1} parent=1 // pred_check_branch
      %211 = sbr.rel (0) target = $region105
    $region104: #{tpu_custom_call.1} parent=1 // pred_region
      %212 = dma.done [#allocation22], 16
    $region105: #{tpu_custom_call.1} parent=1 // pred_fallthru
      _
    // Predicated region
    $region106: #{tpu_custom_call.1} parent=1 // pred_check
      _
    $region107: #{tpu_custom_call.1} parent=1 // pred_check_branch
      %214 = sbr.rel (0) target = $region109
    $region108: #{tpu_custom_call.1} parent=1 // pred_region
      %215 = dma.done [#allocation22], 16
    $region109: #{tpu_custom_call.1} parent=1 // pred_fallthru
      _
    %v216 = vld [vmem:[#allocation3] sm:$0xff]
    %v217 = vld [vmem:[#allocation3 + $0x8] sm:$0xff]
    %v218 = vld [vmem:[#allocation3 + $0x10] sm:$0xff]
    %v219 = vld [vmem:[#allocation3 + $0x18] sm:$0xff]
    %v220 = vld [vmem:[#allocation3 + $0x20] sm:$0xff]
    %v221 = vld [vmem:[#allocation3 + $0x28] sm:$0xff]
    %v222 = vld [vmem:[#allocation3 + $0x30] sm:$0xff]
    %v223 = vld [vmem:[#allocation3 + $0x38] sm:$0xff]
    %v224 = vlaneseq
    %v225 = vshrl.u32 %v224, 7
    %v226 = vadd.s32 %v225, 8
    %v227 = vadd.s32 %v225, 16
    %v228 = vadd.s32 %v225, 24
    %v229 = vadd.s32 %v225, 32
    %v230 = vadd.s32 %v225, 40
    %v231 = vadd.s32 %v225, 48
    %v232 = vadd.s32 %v225, 56
    %v233 = vld [vmem:[#allocation8] sm:$0x1]
    %v234 = vlaneseq
    %v235 = vshrl.u32 %v234, 7
    %v236 = vsub.s32 0, %v235
    %v237 = vrot.slane %v233, %v236
    %vm238 = vcmp.eq.s32.totalorder %v225, %v237
    %vm239 = vcmp.eq.s32.totalorder %v226, %v237
    %vm240 = vcmp.eq.s32.totalorder %v227, %v237
    %vm241 = vcmp.eq.s32.totalorder %v228, %v237
    %vm242 = vcmp.eq.s32.totalorder %v229, %v237
    %vm243 = vcmp.eq.s32.totalorder %v230, %v237
    %vm244 = vcmp.eq.s32.totalorder %v231, %v237
    %vm245 = vcmp.eq.s32.totalorder %v232, %v237
    %v246 = vsel %vm238, 1, 0
    %v247 = vsel %vm239, 1, 0
    %v248 = vsel %vm240, 1, 0
    %v249 = vsel %vm241, 1, 0
    %v250 = vsel %vm242, 1, 0
    %v251 = vsel %vm243, 1, 0
    %v252 = vsel %vm244, 1, 0
    %v253 = vsel %vm245, 1, 0
    %v254 = vcvt.s32.f32 %v246
    %v255 = vcvt.s32.f32 %v247
    %v256 = vcvt.s32.f32 %v248
    %v257 = vcvt.s32.f32 %v249
    %v258 = vcvt.s32.f32 %v250
    %v259 = vcvt.s32.f32 %v251
    %v260 = vcvt.s32.f32 %v252
    %v261 = vcvt.s32.f32 %v253
    %v262 = vlaneseq
    %v263 = vand.u32 %v262, 127
    %v264 = vld [vmem:[#allocation6] sm:$0xff]
    %v265 = vld [vmem:[#allocation6 + $0x8] sm:$0xff]
    %v266 = vld [vmem:[#allocation6 + $0x10] sm:$0xff]
    %v267 = vld [vmem:[#allocation6 + $0x18] sm:$0xff]
    %v268 = vld [vmem:[#allocation6 + $0x20] sm:$0xff]
    %v269 = vld [vmem:[#allocation6 + $0x28] sm:$0xff]
    %v270 = vld [vmem:[#allocation6 + $0x30] sm:$0xff]
    %v271 = vld [vmem:[#allocation6 + $0x38] sm:$0xff]
    %v272 = vld [vmem:[#allocation6 + $0x40] sm:$0xff]
    %v273 = vld [vmem:[#allocation6 + $0x48] sm:$0xff]
    %v274 = vld [vmem:[#allocation6 + $0x50] sm:$0xff]
    %v275 = vld [vmem:[#allocation6 + $0x58] sm:$0xff]
    %v276 = vld [vmem:[#allocation6 + $0x60] sm:$0xff]
    %v277 = vld [vmem:[#allocation6 + $0x68] sm:$0xff]
    %v278 = vld [vmem:[#allocation6 + $0x70] sm:$0xff]
    %v279 = vld [vmem:[#allocation6 + $0x78] sm:$0xff]
    %280 = vset.pattern.permute.xlu0 0
    %281 = vperm.xlu0 %280, %v264
    %v282 = vpop.permute.xlu0 %281
    %283 = vset.pattern.permute.xlu0 0
    %284 = vperm.xlu0 %283, %v265
    %v285 = vpop.permute.xlu0 %284
    %286 = vset.pattern.permute.xlu0 0
    %287 = vperm.xlu0 %286, %v266
    %v288 = vpop.permute.xlu0 %287
    %289 = vset.pattern.permute.xlu0 0
    %290 = vperm.xlu0 %289, %v267
    %v291 = vpop.permute.xlu0 %290
    %292 = vset.pattern.permute.xlu0 0
    %293 = vperm.xlu0 %292, %v268
    %v294 = vpop.permute.xlu0 %293
    %295 = vset.pattern.permute.xlu0 0
    %296 = vperm.xlu0 %295, %v269
    %v297 = vpop.permute.xlu0 %296
    %298 = vset.pattern.permute.xlu0 0
    %299 = vperm.xlu0 %298, %v270
    %v300 = vpop.permute.xlu0 %299
    %301 = vset.pattern.permute.xlu0 0
    %302 = vperm.xlu0 %301, %v271
    %v303 = vpop.permute.xlu0 %302
    %304 = vset.pattern.permute.xlu0 0
    %305 = vperm.xlu0 %304, %v272
    %v306 = vpop.permute.xlu0 %305
    %307 = vset.pattern.permute.xlu0 0
    %308 = vperm.xlu0 %307, %v273
    %v309 = vpop.permute.xlu0 %308
    %310 = vset.pattern.permute.xlu0 0
    %311 = vperm.xlu0 %310, %v274
    %v312 = vpop.permute.xlu0 %311
    %313 = vset.pattern.permute.xlu0 0
    %314 = vperm.xlu0 %313, %v275
    %v315 = vpop.permute.xlu0 %314
    %316 = vset.pattern.permute.xlu0 0
    %317 = vperm.xlu0 %316, %v276
    %v318 = vpop.permute.xlu0 %317
    %319 = vset.pattern.permute.xlu0 0
    %320 = vperm.xlu0 %319, %v277
    %v321 = vpop.permute.xlu0 %320
    %322 = vset.pattern.permute.xlu0 0
    %323 = vperm.xlu0 %322, %v278
    %v324 = vpop.permute.xlu0 %323
    %325 = vset.pattern.permute.xlu0 0
    %326 = vperm.xlu0 %325, %v279
    %v327 = vpop.permute.xlu0 %326
    %vm328 = vcmp.eq.s32.totalorder %v263, %v282
    %vm329 = vcmp.eq.s32.totalorder %v263, %v285
    %vm330 = vcmp.eq.s32.totalorder %v263, %v288
    %vm331 = vcmp.eq.s32.totalorder %v263, %v291
    %vm332 = vcmp.eq.s32.totalorder %v263, %v294
    %vm333 = vcmp.eq.s32.totalorder %v263, %v297
    %vm334 = vcmp.eq.s32.totalorder %v263, %v300
    %vm335 = vcmp.eq.s32.totalorder %v263, %v303
    %vm336 = vcmp.eq.s32.totalorder %v263, %v306
    %vm337 = vcmp.eq.s32.totalorder %v263, %v309
    %vm338 = vcmp.eq.s32.totalorder %v263, %v312
    %vm339 = vcmp.eq.s32.totalorder %v263, %v315
    %vm340 = vcmp.eq.s32.totalorder %v263, %v318
    %vm341 = vcmp.eq.s32.totalorder %v263, %v321
    %vm342 = vcmp.eq.s32.totalorder %v263, %v324
    %vm343 = vcmp.eq.s32.totalorder %v263, %v327
    %v344 = vsel %vm328, 1, 0
    %v345 = vsel %vm329, 1, 0
    %v346 = vsel %vm330, 1, 0
    %v347 = vsel %vm331, 1, 0
    %v348 = vsel %vm332, 1, 0
    %v349 = vsel %vm333, 1, 0
    %v350 = vsel %vm334, 1, 0
    %v351 = vsel %vm335, 1, 0
    %v352 = vsel %vm336, 1, 0
    %v353 = vsel %vm337, 1, 0
    %v354 = vsel %vm338, 1, 0
    %v355 = vsel %vm339, 1, 0
    %v356 = vsel %vm340, 1, 0
    %v357 = vsel %vm341, 1, 0
    %v358 = vsel %vm342, 1, 0
    %v359 = vsel %vm343, 1, 0
    %v360 = vcvt.s32.f32 %v344
    %v361 = vcvt.s32.f32 %v345
    %v362 = vcvt.s32.f32 %v346
    %v363 = vcvt.s32.f32 %v347
    %v364 = vcvt.s32.f32 %v348
    %v365 = vcvt.s32.f32 %v349
    %v366 = vcvt.s32.f32 %v350
    %v367 = vcvt.s32.f32 %v351
    %v368 = vcvt.s32.f32 %v352
    %v369 = vcvt.s32.f32 %v353
    %v370 = vcvt.s32.f32 %v354
    %v371 = vcvt.s32.f32 %v355
    %v372 = vcvt.s32.f32 %v356
    %v373 = vcvt.s32.f32 %v357
    %v374 = vcvt.s32.f32 %v358
    %v375 = vcvt.s32.f32 %v359
    %376 = vmatprep.subr.mxu0 0.0
    %377 = vmatpush1.msra.mxu0 %v360
    %378 = vmatprep.subr.mxu0 0.0
    %379 = vmatpush1.msra.mxu0 %v361
    %380 = vmatprep.subr.mxu0 0.0
    %381 = vmatpush1.msra.mxu0 %v362
    %382 = vmatprep.subr.mxu0 0.0
    %383 = vmatpush1.msra.mxu0 %v363
    %384 = vmatprep.subr.mxu0 0.0
    %385 = vmatpush1.msra.mxu0 %v364
    %386 = vmatprep.subr.mxu0 0.0
    %387 = vmatpush1.msra.mxu0 %v365
    %388 = vmatprep.subr.mxu0 0.0
    %389 = vmatpush1.msra.mxu0 %v366
    %390 = vmatprep.subr.mxu0 0.0
    %391 = vmatpush1.msra.mxu0 %v367
    %392 = vmatprep.subr.mxu0 0.0
    %393 = vmatpush1.msra.mxu0 %v368
    %394 = vmatprep.subr.mxu0 0.0
    %395 = vmatpush1.msra.mxu0 %v369
    %396 = vmatprep.subr.mxu0 0.0
    %397 = vmatpush1.msra.mxu0 %v370
    %398 = vmatprep.subr.mxu0 0.0
    %399 = vmatpush1.msra.mxu0 %v371
    %400 = vmatprep.subr.mxu0 0.0
    %401 = vmatpush1.msra.mxu0 %v372
    %402 = vmatprep.subr.mxu0 0.0
    %403 = vmatpush1.msra.mxu0 %v373
    %404 = vmatprep.subr.mxu0 0.0
    %405 = vmatpush1.msra.mxu0 %v374
    %406 = vmatprep.subr.mxu0 0.0
    %407 = vmatpush1.msra.mxu0 %v375
    %408 = vmatprep.subr.mxu0 0.0
    %409 = vmatpush1.msra.mxu0 0.0
    %410 = vmatprep.subr.mxu0 0.0
    %411 = vmatpush1.msra.mxu0 0.0
    %412 = vmatprep.subr.mxu0 0.0
    %413 = vmatpush1.msra.mxu0 0.0
    %414 = vmatprep.subr.mxu0 0.0
    %415 = vmatpush1.msra.mxu0 0.0
    %416 = vmatprep.subr.mxu0 0.0
    %417 = vmatpush1.msra.mxu0 0.0
    %418 = vmatprep.subr.mxu0 0.0
    %419 = vmatpush1.msra.mxu0 0.0
    %420 = vmatprep.subr.mxu0 0.0
    %421 = vmatpush1.msra.mxu0 0.0
    %422 = vmatprep.subr.mxu0 0.0
    %423 = vmatpush1.msra.mxu0 0.0
    %424 = vmatprep.subr.mxu0 0.0
    %425 = vmatpush1.msra.mxu0 0.0
    %426 = vmatprep.subr.mxu0 0.0
    %427 = vmatpush1.msra.mxu0 0.0
    %428 = vmatprep.subr.mxu0 0.0
    %429 = vmatpush1.msra.mxu0 0.0
    %430 = vmatprep.subr.mxu0 0.0
    %431 = vmatpush1.msra.mxu0 0.0
    %432 = vmatprep.subr.mxu0 0.0
    %433 = vmatpush1.msra.mxu0 0.0
    %434 = vmatprep.subr.mxu0 0.0
    %435 = vmatpush1.msra.mxu0 0.0
    %436 = vmatprep.subr.mxu0 0.0
    %437 = vmatpush1.msra.mxu0 0.0
    %438 = vmatprep.subr.mxu0 0.0
    %439 = vmatpush1.msra.mxu0 0.0
    %440 = vmatprep.mubr.f32.mxu0 0.0
    %441 = vmatmul.mubr.f32.gmra.mrb[0].mxu0 %v254
    %v442 = vpop.f32.mrb[0].mxu0
    %v443 = vadd.f32 0.0, %v442
    %v444 = vpop.f32.mrb[0].mxu0
    %445 = vmatprep.mubr.f32.mxu0 0.0
    %446 = vmatmul.mubr.f32.gmra.mrb[0].mxu0 %v255
    %v447 = vpop.f32.mrb[0].mxu0
    %v448 = vadd.f32 0.0, %v447
    %v449 = vpop.f32.mrb[0].mxu0
    %450 = vmatprep.mubr.f32.mxu0 0.0
    %451 = vmatmul.mubr.f32.gmra.mrb[0].mxu0 %v256
    %v452 = vpop.f32.mrb[0].mxu0
    %v453 = vadd.f32 0.0, %v452
    %v454 = vpop.f32.mrb[0].mxu0
    %455 = vmatprep.mubr.f32.mxu0 0.0
    %456 = vmatmul.mubr.f32.gmra.mrb[0].mxu0 %v257
    %v457 = vpop.f32.mrb[0].mxu0
    %v458 = vadd.f32 0.0, %v457
    %v459 = vpop.f32.mrb[0].mxu0
    %460 = vmatprep.mubr.f32.mxu0 0.0
    %461 = vmatmul.mubr.f32.gmra.mrb[0].mxu0 %v258
    %v462 = vpop.f32.mrb[0].mxu0
    %v463 = vadd.f32 0.0, %v462
    %v464 = vpop.f32.mrb[0].mxu0
    %465 = vmatprep.mubr.f32.mxu0 0.0
    %466 = vmatmul.mubr.f32.gmra.mrb[0].mxu0 %v259
    %v467 = vpop.f32.mrb[0].mxu0
    %v468 = vadd.f32 0.0, %v467
    %v469 = vpop.f32.mrb[0].mxu0
    %470 = vmatprep.mubr.f32.mxu0 0.0
    %471 = vmatmul.mubr.f32.gmra.mrb[0].mxu0 %v260
    %v472 = vpop.f32.mrb[0].mxu0
    %v473 = vadd.f32 0.0, %v472
    %v474 = vpop.f32.mrb[0].mxu0
    %475 = vmatprep.mubr.f32.mxu0 0.0
    %476 = vmatmul.mubr.f32.gmra.mrb[0].mxu0 %v261
    %v477 = vpop.f32.mrb[0].mxu0
    %v478 = vadd.f32 0.0, %v477
    %v479 = vpop.f32.mrb[0].mxu0
    %480 = vdwg.mxu0
    %481 = vadd.xlane.f32.xlu0 %v254
    %v482 = vpop.xlane.xlu0 %481
    %483 = vadd.xlane.f32.xlu0 %v255
    %v484 = vpop.xlane.xlu0 %483
    %485 = vadd.xlane.f32.xlu0 %v256
    %v486 = vpop.xlane.xlu0 %485
    %487 = vadd.xlane.f32.xlu0 %v257
    %v488 = vpop.xlane.xlu0 %487
    %489 = vadd.xlane.f32.xlu0 %v258
    %v490 = vpop.xlane.xlu0 %489
    %491 = vadd.xlane.f32.xlu0 %v259
    %v492 = vpop.xlane.xlu0 %491
    %493 = vadd.xlane.f32.xlu0 %v260
    %v494 = vpop.xlane.xlu0 %493
    %495 = vadd.xlane.f32.xlu0 %v261
    %v496 = vpop.xlane.xlu0 %495
    %v497 = vmax.f32 %v482, 1.0
    %v498 = vmax.f32 %v484, 1.0
    %v499 = vmax.f32 %v486, 1.0
    %v500 = vmax.f32 %v488, 1.0
    %v501 = vmax.f32 %v490, 1.0
    %v502 = vmax.f32 %v492, 1.0
    %v503 = vmax.f32 %v494, 1.0
    %v504 = vmax.f32 %v496, 1.0
    %v505 = vrcp.pop %v497
    %v506 = vmul.f32 1.0, %v505
    %v507 = vrcp.pop %v498
    %v508 = vmul.f32 1.0, %v507
    %v509 = vrcp.pop %v499
    %v510 = vmul.f32 1.0, %v509
    %v511 = vrcp.pop %v500
    %v512 = vmul.f32 1.0, %v511
    %v513 = vrcp.pop %v501
    %v514 = vmul.f32 1.0, %v513
    %v515 = vrcp.pop %v502
    %v516 = vmul.f32 1.0, %v515
    %v517 = vrcp.pop %v503
    %v518 = vmul.f32 1.0, %v517
    %v519 = vrcp.pop %v504
    %v520 = vmul.f32 1.0, %v519
    %v521 = vld [vmem:[#allocation9] sm:$0xff]
    %v522 = vld [vmem:[#allocation9 + $0x8] sm:$0xff]
    %v523 = vld [vmem:[#allocation9 + $0x10] sm:$0xff]
    %v524 = vld [vmem:[#allocation9 + $0x18] sm:$0xff]
    %vm525 = vcmask 261120
    %v527 = vsel %vm525, %v216, 0
    %v530 = vsel %vm525, %v217, 0
    %v533 = vsel %vm525, %v218, 0
    %v536 = vsel %vm525, %v219, 0
    %v539 = vsel %vm525, %v220, 0
    %v542 = vsel %vm525, %v221, 0
    %v545 = vsel %vm525, %v222, 0
    %v548 = vsel %vm525, %v223, 0
    %550 = vmatprep.subr.mxu0 0.0
    %551 = vmatpush1.msra.mxu0 %v521
    %552 = vmatprep.subr.mxu0 0.0
    %553 = vmatpush1.msra.mxu0 %v522
    %554 = vmatprep.subr.mxu0 0.0
    %555 = vmatpush1.msra.mxu0 %v523
    %556 = vmatprep.subr.mxu0 0.0
    %557 = vmatpush1.msra.mxu0 %v524
    %558 = vmatprep.subr.mxu0 0.0
    %559 = vmatpush1.msra.mxu0 0.0
    %560 = vmatprep.subr.mxu0 0.0
    %561 = vmatpush1.msra.mxu0 0.0
    %562 = vmatprep.subr.mxu0 0.0
    %563 = vmatpush1.msra.mxu0 0.0
    %564 = vmatprep.subr.mxu0 0.0
    %565 = vmatpush1.msra.mxu0 0.0
    %566 = vmatprep.subr.mxu0 0.0
    %567 = vmatpush1.msra.mxu0 0.0
    %568 = vmatprep.subr.mxu0 0.0
    %569 = vmatpush1.msra.mxu0 0.0
    %570 = vmatprep.subr.mxu0 0.0
    %571 = vmatpush1.msra.mxu0 0.0
    %572 = vmatprep.subr.mxu0 0.0
    %573 = vmatpush1.msra.mxu0 0.0
    %574 = vmatprep.subr.mxu0 0.0
    %575 = vmatpush1.msra.mxu0 0.0
    %576 = vmatprep.subr.mxu0 0.0
    %577 = vmatpush1.msra.mxu0 0.0
    %578 = vmatprep.subr.mxu0 0.0
    %579 = vmatpush1.msra.mxu0 0.0
    %580 = vmatprep.subr.mxu0 0.0
    %581 = vmatpush1.msra.mxu0 0.0
    %582 = vmatprep.subr.mxu0 0.0
    %583 = vmatpush1.msra.mxu0 0.0
    %584 = vmatprep.subr.mxu0 0.0
    %585 = vmatpush1.msra.mxu0 0.0
    %586 = vmatprep.subr.mxu0 0.0
    %587 = vmatpush1.msra.mxu0 0.0
    %588 = vmatprep.subr.mxu0 0.0
    %589 = vmatpush1.msra.mxu0 0.0
    %590 = vmatprep.subr.mxu0 0.0
    %591 = vmatpush1.msra.mxu0 0.0
    %592 = vmatprep.subr.mxu0 0.0
    %593 = vmatpush1.msra.mxu0 0.0
    %594 = vmatprep.subr.mxu0 0.0
    %595 = vmatpush1.msra.mxu0 0.0
    %596 = vmatprep.subr.mxu0 0.0
    %597 = vmatpush1.msra.mxu0 0.0
    %598 = vmatprep.subr.mxu0 0.0
    %599 = vmatpush1.msra.mxu0 0.0
    %600 = vmatprep.subr.mxu0 0.0
    %601 = vmatpush1.msra.mxu0 0.0
    %602 = vmatprep.subr.mxu0 0.0
    %603 = vmatpush1.msra.mxu0 0.0
    %604 = vmatprep.subr.mxu0 0.0
    %605 = vmatpush1.msra.mxu0 0.0
    %606 = vmatprep.subr.mxu0 0.0
    %607 = vmatpush1.msra.mxu0 0.0
    %608 = vmatprep.subr.mxu0 0.0
    %609 = vmatpush1.msra.mxu0 0.0
    %610 = vmatprep.subr.mxu0 0.0
    %611 = vmatpush1.msra.mxu0 0.0
    %612 = vmatprep.subr.mxu0 0.0
    %613 = vmatpush1.msra.mxu0 0.0
    %614 = vmatprep.mubr.f32.mxu0 0.0
    %615 = vmatmul.mubr.f32.gmra.mrb[0].mxu0 %v527
    %v616 = vpop.f32.mrb[0].mxu0
    %v617 = vadd.f32 0.0, %v616
    %v618 = vpop.f32.mrb[0].mxu0
    %619 = vmatprep.mubr.f32.mxu0 0.0
    %620 = vmatmul.mubr.f32.gmra.mrb[0].mxu0 %v530
    %v621 = vpop.f32.mrb[0].mxu0
    %v622 = vadd.f32 0.0, %v621
    %v623 = vpop.f32.mrb[0].mxu0
    %624 = vmatprep.mubr.f32.mxu0 0.0
    %625 = vmatmul.mubr.f32.gmra.mrb[0].mxu0 %v533
    %v626 = vpop.f32.mrb[0].mxu0
    %v627 = vadd.f32 0.0, %v626
    %v628 = vpop.f32.mrb[0].mxu0
    %629 = vmatprep.mubr.f32.mxu0 0.0
    %630 = vmatmul.mubr.f32.gmra.mrb[0].mxu0 %v536
    %v631 = vpop.f32.mrb[0].mxu0
    %v632 = vadd.f32 0.0, %v631
    %v633 = vpop.f32.mrb[0].mxu0
    %634 = vmatprep.mubr.f32.mxu0 0.0
    %635 = vmatmul.mubr.f32.gmra.mrb[0].mxu0 %v539
    %v636 = vpop.f32.mrb[0].mxu0
    %v637 = vadd.f32 0.0, %v636
    %v638 = vpop.f32.mrb[0].mxu0
    %639 = vmatprep.mubr.f32.mxu0 0.0
    %640 = vmatmul.mubr.f32.gmra.mrb[0].mxu0 %v542
    %v641 = vpop.f32.mrb[0].mxu0
    %v642 = vadd.f32 0.0, %v641
    %v643 = vpop.f32.mrb[0].mxu0
    %644 = vmatprep.mubr.f32.mxu0 0.0
    %645 = vmatmul.mubr.f32.gmra.mrb[0].mxu0 %v545
    %v646 = vpop.f32.mrb[0].mxu0
    %v647 = vadd.f32 0.0, %v646
    %v648 = vpop.f32.mrb[0].mxu0
    %649 = vmatprep.mubr.f32.mxu0 0.0
    %650 = vmatmul.mubr.f32.gmra.mrb[0].mxu0 %v548
    %v651 = vpop.f32.mrb[0].mxu0
    %v652 = vadd.f32 0.0, %v651
    %v653 = vpop.f32.mrb[0].mxu0
    %654 = vdwg.mxu0
    %vm655 = vcmask 523264
    %v657 = vsel %vm655, %v443, 0
    %v660 = vsel %vm655, %v448, 0
    %v663 = vsel %vm655, %v453, 0
    %v666 = vsel %vm655, %v458, 0
    %v669 = vsel %vm655, %v463, 0
    %v672 = vsel %vm655, %v468, 0
    %v675 = vsel %vm655, %v473, 0
    %v678 = vsel %vm655, %v478, 0
    %680 = vmatprep.subr.mxu0 0.0
    %681 = vmatpush1.msra.mxu0 %v617
    %682 = vmatprep.subr.mxu0 0.0
    %683 = vmatpush1.msra.mxu0 %v622
    %684 = vmatprep.subr.mxu0 0.0
    %685 = vmatpush1.msra.mxu0 %v627
    %686 = vmatprep.subr.mxu0 0.0
    %687 = vmatpush1.msra.mxu0 %v632
    %688 = vmatprep.subr.mxu0 0.0
    %689 = vmatpush1.msra.mxu0 %v637
    %690 = vmatprep.subr.mxu0 0.0
    %691 = vmatpush1.msra.mxu0 %v642
    %692 = vmatprep.subr.mxu0 0.0
    %693 = vmatpush1.msra.mxu0 %v647
    %694 = vmatprep.subr.mxu0 0.0
    %695 = vmatpush1.msra.mxu0 %v652
    %696 = vmatprep.subr.mxu0 0.0
    %697 = vmatpush1.msra.mxu0 0.0
    %698 = vmatprep.subr.mxu0 0.0
    %699 = vmatpush1.msra.mxu0 0.0
    %700 = vmatprep.subr.mxu0 0.0
    %701 = vmatpush1.msra.mxu0 0.0
    %702 = vmatprep.subr.mxu0 0.0
    %703 = vmatpush1.msra.mxu0 0.0
    %704 = vmatprep.subr.mxu0 0.0
    %705 = vmatpush1.msra.mxu0 0.0
    %706 = vmatprep.subr.mxu0 0.0
    %707 = vmatpush1.msra.mxu0 0.0
    %708 = vmatprep.subr.mxu0 0.0
    %709 = vmatpush1.msra.mxu0 0.0
    %710 = vmatprep.subr.mxu0 0.0
    %711 = vmatpush1.msra.mxu0 0.0
    %712 = vmatprep.subr.mxu0 0.0
    %713 = vmatpush1.msra.mxu0 0.0
    %714 = vmatprep.subr.mxu0 0.0
    %715 = vmatpush1.msra.mxu0 0.0
    %716 = vmatprep.subr.mxu0 0.0
    %717 = vmatpush1.msra.mxu0 0.0
    %718 = vmatprep.subr.mxu0 0.0
    %719 = vmatpush1.msra.mxu0 0.0
    %720 = vmatprep.subr.mxu0 0.0
    %721 = vmatpush1.msra.mxu0 0.0
    %722 = vmatprep.subr.mxu0 0.0
    %723 = vmatpush1.msra.mxu0 0.0
    %724 = vmatprep.subr.mxu0 0.0
    %725 = vmatpush1.msra.mxu0 0.0
    %726 = vmatprep.subr.mxu0 0.0
    %727 = vmatpush1.msra.mxu0 0.0
    %728 = vmatprep.subr.mxu0 0.0
    %729 = vmatpush1.msra.mxu0 0.0
    %730 = vmatprep.subr.mxu0 0.0
    %731 = vmatpush1.msra.mxu0 0.0
    %732 = vmatprep.subr.mxu0 0.0
    %733 = vmatpush1.msra.mxu0 0.0
    %734 = vmatprep.subr.mxu0 0.0
    %735 = vmatpush1.msra.mxu0 0.0
    %736 = vmatprep.subr.mxu0 0.0
    %737 = vmatpush1.msra.mxu0 0.0
    %738 = vmatprep.subr.mxu0 0.0
    %739 = vmatpush1.msra.mxu0 0.0
    %740 = vmatprep.subr.mxu0 0.0
    %741 = vmatpush1.msra.mxu0 0.0
    %742 = vmatprep.subr.mxu0 0.0
    %743 = vmatpush1.msra.mxu0 0.0
    %744 = vmatprep.mubr.f32.mxu0 0.0
    %745 = vmatmul.mubr.f32.gmra.mrb[0].mxu0 %v657
    %v746 = vpop.f32.mrb[0].mxu0
    %v747 = vadd.f32 0.0, %v746
    %v748 = vpop.f32.mrb[0].mxu0
    %749 = vmatprep.mubr.f32.mxu0 0.0
    %750 = vmatmul.mubr.f32.gmra.mrb[0].mxu0 %v660
    %v751 = vpop.f32.mrb[0].mxu0
    %v752 = vadd.f32 0.0, %v751
    %v753 = vpop.f32.mrb[0].mxu0
    %754 = vmatprep.mubr.f32.mxu0 0.0
    %755 = vmatmul.mubr.f32.gmra.mrb[0].mxu0 %v663
    %v756 = vpop.f32.mrb[0].mxu0
    %v757 = vadd.f32 0.0, %v756
    %v758 = vpop.f32.mrb[0].mxu0
    %759 = vmatprep.mubr.f32.mxu0 0.0
    %760 = vmatmul.mubr.f32.gmra.mrb[0].mxu0 %v666
    %v761 = vpop.f32.mrb[0].mxu0
    %v762 = vadd.f32 0.0, %v761
    %v763 = vpop.f32.mrb[0].mxu0
    %764 = vmatprep.mubr.f32.mxu0 0.0
    %765 = vmatmul.mubr.f32.gmra.mrb[0].mxu0 %v669
    %v766 = vpop.f32.mrb[0].mxu0
    %v767 = vadd.f32 0.0, %v766
    %v768 = vpop.f32.mrb[0].mxu0
    %769 = vmatprep.mubr.f32.mxu0 0.0
    %770 = vmatmul.mubr.f32.gmra.mrb[0].mxu0 %v672
    %v771 = vpop.f32.mrb[0].mxu0
    %v772 = vadd.f32 0.0, %v771
    %v773 = vpop.f32.mrb[0].mxu0
    %774 = vmatprep.mubr.f32.mxu0 0.0
    %775 = vmatmul.mubr.f32.gmra.mrb[0].mxu0 %v675
    %v776 = vpop.f32.mrb[0].mxu0
    %v777 = vadd.f32 0.0, %v776
    %v778 = vpop.f32.mrb[0].mxu0
    %779 = vmatprep.mubr.f32.mxu0 0.0
    %780 = vmatmul.mubr.f32.gmra.mrb[0].mxu0 %v678
    %v781 = vpop.f32.mrb[0].mxu0
    %v782 = vadd.f32 0.0, %v781
    %v783 = vpop.f32.mrb[0].mxu0
    %784 = vdwg.mxu0
    %v785 = vmul.f32 %v747, %v506
    %v786 = vmul.f32 %v752, %v508
    %v787 = vmul.f32 %v757, %v510
    %v788 = vmul.f32 %v762, %v512
    %v789 = vmul.f32 %v767, %v514
    %v790 = vmul.f32 %v772, %v516
    %v791 = vmul.f32 %v777, %v518
    %v792 = vmul.f32 %v782, %v520
    %v793 = vld [vmem:[#allocation11] sm:$0xff]
    %v794 = vld [vmem:[#allocation11 + $0x8] sm:$0xff]
    %v795 = vld [vmem:[#allocation11 + $0x10] sm:$0xff]
    %v796 = vld [vmem:[#allocation11 + $0x18] sm:$0xff]
    %797 = vmatprep.subr.mxu0 0.0
    %798 = vmatpush1.msra.mxu0 %v793
    %799 = vmatprep.subr.mxu0 0.0
    %800 = vmatpush1.msra.mxu0 %v794
    %801 = vmatprep.subr.mxu0 0.0
    %802 = vmatpush1.msra.mxu0 %v795
    %803 = vmatprep.subr.mxu0 0.0
    %804 = vmatpush1.msra.mxu0 %v796
    %805 = vmatprep.subr.mxu0 0.0
    %806 = vmatpush1.msra.mxu0 0.0
    %807 = vmatprep.subr.mxu0 0.0
    %808 = vmatpush1.msra.mxu0 0.0
    %809 = vmatprep.subr.mxu0 0.0
    %810 = vmatpush1.msra.mxu0 0.0
    %811 = vmatprep.subr.mxu0 0.0
    %812 = vmatpush1.msra.mxu0 0.0
    %813 = vmatprep.subr.mxu0 0.0
    %814 = vmatpush1.msra.mxu0 0.0
    %815 = vmatprep.subr.mxu0 0.0
    %816 = vmatpush1.msra.mxu0 0.0
    %817 = vmatprep.subr.mxu0 0.0
    %818 = vmatpush1.msra.mxu0 0.0
    %819 = vmatprep.subr.mxu0 0.0
    %820 = vmatpush1.msra.mxu0 0.0
    %821 = vmatprep.subr.mxu0 0.0
    %822 = vmatpush1.msra.mxu0 0.0
    %823 = vmatprep.subr.mxu0 0.0
    %824 = vmatpush1.msra.mxu0 0.0
    %825 = vmatprep.subr.mxu0 0.0
    %826 = vmatpush1.msra.mxu0 0.0
    %827 = vmatprep.subr.mxu0 0.0
    %828 = vmatpush1.msra.mxu0 0.0
    %829 = vmatprep.subr.mxu0 0.0
    %830 = vmatpush1.msra.mxu0 0.0
    %831 = vmatprep.subr.mxu0 0.0
    %832 = vmatpush1.msra.mxu0 0.0
    %833 = vmatprep.subr.mxu0 0.0
    %834 = vmatpush1.msra.mxu0 0.0
    %835 = vmatprep.subr.mxu0 0.0
    %836 = vmatpush1.msra.mxu0 0.0
    %837 = vmatprep.subr.mxu0 0.0
    %838 = vmatpush1.msra.mxu0 0.0
    %839 = vmatprep.subr.mxu0 0.0
    %840 = vmatpush1.msra.mxu0 0.0
    %841 = vmatprep.subr.mxu0 0.0
    %842 = vmatpush1.msra.mxu0 0.0
    %843 = vmatprep.subr.mxu0 0.0
    %844 = vmatpush1.msra.mxu0 0.0
    %845 = vmatprep.subr.mxu0 0.0
    %846 = vmatpush1.msra.mxu0 0.0
    %847 = vmatprep.subr.mxu0 0.0
    %848 = vmatpush1.msra.mxu0 0.0
    %849 = vmatprep.subr.mxu0 0.0
    %850 = vmatpush1.msra.mxu0 0.0
    %851 = vmatprep.subr.mxu0 0.0
    %852 = vmatpush1.msra.mxu0 0.0
    %853 = vmatprep.subr.mxu0 0.0
    %854 = vmatpush1.msra.mxu0 0.0
    %855 = vmatprep.subr.mxu0 0.0
    %856 = vmatpush1.msra.mxu0 0.0
    %857 = vmatprep.subr.mxu0 0.0
    %858 = vmatpush1.msra.mxu0 0.0
    %859 = vmatprep.subr.mxu0 0.0
    %860 = vmatpush1.msra.mxu0 0.0
    %861 = vmatprep.mubr.f32.mxu0 0.0
    %862 = vmatmul.mubr.f32.gmra.mrb[0].mxu0 %v527
    %v863 = vpop.f32.mrb[0].mxu0
    %v864 = vadd.f32 0.0, %v863
    %v865 = vpop.f32.mrb[0].mxu0
    %866 = vmatprep.mubr.f32.mxu0 0.0
    %867 = vmatmul.mubr.f32.gmra.mrb[0].mxu0 %v530
    %v868 = vpop.f32.mrb[0].mxu0
    %v869 = vadd.f32 0.0, %v868
    %v870 = vpop.f32.mrb[0].mxu0
    %871 = vmatprep.mubr.f32.mxu0 0.0
    %872 = vmatmul.mubr.f32.gmra.mrb[0].mxu0 %v533
    %v873 = vpop.f32.mrb[0].mxu0
    %v874 = vadd.f32 0.0, %v873
    %v875 = vpop.f32.mrb[0].mxu0
    %876 = vmatprep.mubr.f32.mxu0 0.0
    %877 = vmatmul.mubr.f32.gmra.mrb[0].mxu0 %v536
    %v878 = vpop.f32.mrb[0].mxu0
    %v879 = vadd.f32 0.0, %v878
    %v880 = vpop.f32.mrb[0].mxu0
    %881 = vmatprep.mubr.f32.mxu0 0.0
    %882 = vmatmul.mubr.f32.gmra.mrb[0].mxu0 %v539
    %v883 = vpop.f32.mrb[0].mxu0
    %v884 = vadd.f32 0.0, %v883
    %v885 = vpop.f32.mrb[0].mxu0
    %886 = vmatprep.mubr.f32.mxu0 0.0
    %887 = vmatmul.mubr.f32.gmra.mrb[0].mxu0 %v542
    %v888 = vpop.f32.mrb[0].mxu0
    %v889 = vadd.f32 0.0, %v888
    %v890 = vpop.f32.mrb[0].mxu0
    %891 = vmatprep.mubr.f32.mxu0 0.0
    %892 = vmatmul.mubr.f32.gmra.mrb[0].mxu0 %v545
    %v893 = vpop.f32.mrb[0].mxu0
    %v894 = vadd.f32 0.0, %v893
    %v895 = vpop.f32.mrb[0].mxu0
    %896 = vmatprep.mubr.f32.mxu0 0.0
    %897 = vmatmul.mubr.f32.gmra.mrb[0].mxu0 %v548
    %v898 = vpop.f32.mrb[0].mxu0
    %v899 = vadd.f32 0.0, %v898
    %v900 = vpop.f32.mrb[0].mxu0
    %901 = vdwg.mxu0
    %v902 = vadd.f32 %v785, %v864
    %v903 = vadd.f32 %v786, %v869
    %v904 = vadd.f32 %v787, %v874
    %v905 = vadd.f32 %v788, %v879
    %v906 = vadd.f32 %v789, %v884
    %v907 = vadd.f32 %v790, %v889
    %v908 = vadd.f32 %v791, %v894
    %v909 = vadd.f32 %v792, %v899
    %v910 = vld [vmem:[#allocation12] sm:$0x1]
    %v912 = vlaneseq
    %v913 = vshrl.u32 %v912, 7
    %v914 = vsub.s32 0, %v913
    %v915 = vrot.slane %v910, %v914
    %v917 = vadd.f32 %v902, %v915
    %v918 = vadd.f32 %v903, %v915
    %v919 = vadd.f32 %v904, %v915
    %v920 = vadd.f32 %v905, %v915
    %v921 = vadd.f32 %v906, %v915
    %v922 = vadd.f32 %v907, %v915
    %v923 = vadd.f32 %v908, %v915
    %v924 = vadd.f32 %v909, %v915
    %v925 = vmax.f32 %v917, 0.0
    %v926 = vmax.f32 %v918, 0.0
    %v927 = vmax.f32 %v919, 0.0
    %v928 = vmax.f32 %v920, 0.0
    %v929 = vmax.f32 %v921, 0.0
    %v930 = vmax.f32 %v922, 0.0
    %v931 = vmax.f32 %v923, 0.0
    %v932 = vmax.f32 %v924, 0.0
    %v933 = vld [vmem:[#allocation14] sm:$0xff]
    %v934 = vld [vmem:[#allocation14 + $0x8] sm:$0xff]
    %v935 = vld [vmem:[#allocation14 + $0x10] sm:$0xff]
    %v936 = vld [vmem:[#allocation14 + $0x18] sm:$0xff]
    %v938 = vsel %vm525, %v925, 0
    %v941 = vsel %vm525, %v926, 0
    %v944 = vsel %vm525, %v927, 0
    %v947 = vsel %vm525, %v928, 0
    %v950 = vsel %vm525, %v929, 0
    %v953 = vsel %vm525, %v930, 0
    %v956 = vsel %vm525, %v931, 0
    %v959 = vsel %vm525, %v932, 0
    %961 = vmatprep.subr.mxu0 0.0
    %962 = vmatpush1.msra.mxu0 %v933
    %963 = vmatprep.subr.mxu0 0.0
    %964 = vmatpush1.msra.mxu0 %v934
    %965 = vmatprep.subr.mxu0 0.0
    %966 = vmatpush1.msra.mxu0 %v935
    %967 = vmatprep.subr.mxu0 0.0
    %968 = vmatpush1.msra.mxu0 %v936
    %969 = vmatprep.subr.mxu0 0.0
    %970 = vmatpush1.msra.mxu0 0.0
    %971 = vmatprep.subr.mxu0 0.0
    %972 = vmatpush1.msra.mxu0 0.0
    %973 = vmatprep.subr.mxu0 0.0
    %974 = vmatpush1.msra.mxu0 0.0
    %975 = vmatprep.subr.mxu0 0.0
    %976 = vmatpush1.msra.mxu0 0.0
    %977 = vmatprep.subr.mxu0 0.0
    %978 = vmatpush1.msra.mxu0 0.0
    %979 = vmatprep.subr.mxu0 0.0
    %980 = vmatpush1.msra.mxu0 0.0
    %981 = vmatprep.subr.mxu0 0.0
    %982 = vmatpush1.msra.mxu0 0.0
    %983 = vmatprep.subr.mxu0 0.0
    %984 = vmatpush1.msra.mxu0 0.0
    %985 = vmatprep.subr.mxu0 0.0
    %986 = vmatpush1.msra.mxu0 0.0
    %987 = vmatprep.subr.mxu0 0.0
    %988 = vmatpush1.msra.mxu0 0.0
    %989 = vmatprep.subr.mxu0 0.0
    %990 = vmatpush1.msra.mxu0 0.0
    %991 = vmatprep.subr.mxu0 0.0
    %992 = vmatpush1.msra.mxu0 0.0
    %993 = vmatprep.subr.mxu0 0.0
    %994 = vmatpush1.msra.mxu0 0.0
    %995 = vmatprep.subr.mxu0 0.0
    %996 = vmatpush1.msra.mxu0 0.0
    %997 = vmatprep.subr.mxu0 0.0
    %998 = vmatpush1.msra.mxu0 0.0
    %999 = vmatprep.subr.mxu0 0.0
    %1000 = vmatpush1.msra.mxu0 0.0
    %1001 = vmatprep.subr.mxu0 0.0
    %1002 = vmatpush1.msra.mxu0 0.0
    %1003 = vmatprep.subr.mxu0 0.0
    %1004 = vmatpush1.msra.mxu0 0.0
    %1005 = vmatprep.subr.mxu0 0.0
    %1006 = vmatpush1.msra.mxu0 0.0
    %1007 = vmatprep.subr.mxu0 0.0
    %1008 = vmatpush1.msra.mxu0 0.0
    %1009 = vmatprep.subr.mxu0 0.0
    %1010 = vmatpush1.msra.mxu0 0.0
    %1011 = vmatprep.subr.mxu0 0.0
    %1012 = vmatpush1.msra.mxu0 0.0
    %1013 = vmatprep.subr.mxu0 0.0
    %1014 = vmatpush1.msra.mxu0 0.0
    %1015 = vmatprep.subr.mxu0 0.0
    %1016 = vmatpush1.msra.mxu0 0.0
    %1017 = vmatprep.subr.mxu0 0.0
    %1018 = vmatpush1.msra.mxu0 0.0
    %1019 = vmatprep.subr.mxu0 0.0
    %1020 = vmatpush1.msra.mxu0 0.0
    %1021 = vmatprep.subr.mxu0 0.0
    %1022 = vmatpush1.msra.mxu0 0.0
    %1023 = vmatprep.subr.mxu0 0.0
    %1024 = vmatpush1.msra.mxu0 0.0
    %1025 = vmatprep.mubr.f32.mxu0 0.0
    %1026 = vmatmul.mubr.f32.gmra.mrb[0].mxu0 %v938
    %v1027 = vpop.f32.mrb[0].mxu0
    %v1028 = vadd.f32 0.0, %v1027
    %v1029 = vpop.f32.mrb[0].mxu0
    %1030 = vmatprep.mubr.f32.mxu0 0.0
    %1031 = vmatmul.mubr.f32.gmra.mrb[0].mxu0 %v941
    %v1032 = vpop.f32.mrb[0].mxu0
    %v1033 = vadd.f32 0.0, %v1032
    %v1034 = vpop.f32.mrb[0].mxu0
    %1035 = vmatprep.mubr.f32.mxu0 0.0
    %1036 = vmatmul.mubr.f32.gmra.mrb[0].mxu0 %v944
    %v1037 = vpop.f32.mrb[0].mxu0
    %v1038 = vadd.f32 0.0, %v1037
    %v1039 = vpop.f32.mrb[0].mxu0
    %1040 = vmatprep.mubr.f32.mxu0 0.0
    %1041 = vmatmul.mubr.f32.gmra.mrb[0].mxu0 %v947
    %v1042 = vpop.f32.mrb[0].mxu0
    %v1043 = vadd.f32 0.0, %v1042
    %v1044 = vpop.f32.mrb[0].mxu0
    %1045 = vmatprep.mubr.f32.mxu0 0.0
    %1046 = vmatmul.mubr.f32.gmra.mrb[0].mxu0 %v950
    %v1047 = vpop.f32.mrb[0].mxu0
    %v1048 = vadd.f32 0.0, %v1047
    %v1049 = vpop.f32.mrb[0].mxu0
    %1050 = vmatprep.mubr.f32.mxu0 0.0
    %1051 = vmatmul.mubr.f32.gmra.mrb[0].mxu0 %v953
    %v1052 = vpop.f32.mrb[0].mxu0
    %v1053 = vadd.f32 0.0, %v1052
    %v1054 = vpop.f32.mrb[0].mxu0
    %1055 = vmatprep.mubr.f32.mxu0 0.0
    %1056 = vmatmul.mubr.f32.gmra.mrb[0].mxu0 %v956
    %v1057 = vpop.f32.mrb[0].mxu0
    %v1058 = vadd.f32 0.0, %v1057
    %v1059 = vpop.f32.mrb[0].mxu0
    %1060 = vmatprep.mubr.f32.mxu0 0.0
    %1061 = vmatmul.mubr.f32.gmra.mrb[0].mxu0 %v959
    %v1062 = vpop.f32.mrb[0].mxu0
    %v1063 = vadd.f32 0.0, %v1062
    %v1064 = vpop.f32.mrb[0].mxu0
    %1065 = vdwg.mxu0
    %1066 = vmatprep.subr.mxu0 0.0
    %1067 = vmatpush1.msra.mxu0 %v1028
    %1068 = vmatprep.subr.mxu0 0.0
    %1069 = vmatpush1.msra.mxu0 %v1033
    %1070 = vmatprep.subr.mxu0 0.0
    %1071 = vmatpush1.msra.mxu0 %v1038
    %1072 = vmatprep.subr.mxu0 0.0
    %1073 = vmatpush1.msra.mxu0 %v1043
    %1074 = vmatprep.subr.mxu0 0.0
    %1075 = vmatpush1.msra.mxu0 %v1048
    %1076 = vmatprep.subr.mxu0 0.0
    %1077 = vmatpush1.msra.mxu0 %v1053
    %1078 = vmatprep.subr.mxu0 0.0
    %1079 = vmatpush1.msra.mxu0 %v1058
    %1080 = vmatprep.subr.mxu0 0.0
    %1081 = vmatpush1.msra.mxu0 %v1063
    %1082 = vmatprep.subr.mxu0 0.0
    %1083 = vmatpush1.msra.mxu0 0.0
    %1084 = vmatprep.subr.mxu0 0.0
    %1085 = vmatpush1.msra.mxu0 0.0
    %1086 = vmatprep.subr.mxu0 0.0
    %1087 = vmatpush1.msra.mxu0 0.0
    %1088 = vmatprep.subr.mxu0 0.0
    %1089 = vmatpush1.msra.mxu0 0.0
    %1090 = vmatprep.subr.mxu0 0.0
    %1091 = vmatpush1.msra.mxu0 0.0
    %1092 = vmatprep.subr.mxu0 0.0
    %1093 = vmatpush1.msra.mxu0 0.0
    %1094 = vmatprep.subr.mxu0 0.0
    %1095 = vmatpush1.msra.mxu0 0.0
    %1096 = vmatprep.subr.mxu0 0.0
    %1097 = vmatpush1.msra.mxu0 0.0
    %1098 = vmatprep.subr.mxu0 0.0
    %1099 = vmatpush1.msra.mxu0 0.0
    %1100 = vmatprep.subr.mxu0 0.0
    %1101 = vmatpush1.msra.mxu0 0.0
    %1102 = vmatprep.subr.mxu0 0.0
    %1103 = vmatpush1.msra.mxu0 0.0
    %1104 = vmatprep.subr.mxu0 0.0
    %1105 = vmatpush1.msra.mxu0 0.0
    %1106 = vmatprep.subr.mxu0 0.0
    %1107 = vmatpush1.msra.mxu0 0.0
    %1108 = vmatprep.subr.mxu0 0.0
    %1109 = vmatpush1.msra.mxu0 0.0
    %1110 = vmatprep.subr.mxu0 0.0
    %1111 = vmatpush1.msra.mxu0 0.0
    %1112 = vmatprep.subr.mxu0 0.0
    %1113 = vmatpush1.msra.mxu0 0.0
    %1114 = vmatprep.subr.mxu0 0.0
    %1115 = vmatpush1.msra.mxu0 0.0
    %1116 = vmatprep.subr.mxu0 0.0
    %1117 = vmatpush1.msra.mxu0 0.0
    %1118 = vmatprep.subr.mxu0 0.0
    %1119 = vmatpush1.msra.mxu0 0.0
    %1120 = vmatprep.subr.mxu0 0.0
    %1121 = vmatpush1.msra.mxu0 0.0
    %1122 = vmatprep.subr.mxu0 0.0
    %1123 = vmatpush1.msra.mxu0 0.0
    %1124 = vmatprep.subr.mxu0 0.0
    %1125 = vmatpush1.msra.mxu0 0.0
    %1126 = vmatprep.subr.mxu0 0.0
    %1127 = vmatpush1.msra.mxu0 0.0
    %1128 = vmatprep.subr.mxu0 0.0
    %1129 = vmatpush1.msra.mxu0 0.0
    %1130 = vmatprep.mubr.f32.mxu0 0.0
    %1131 = vmatmul.mubr.f32.gmra.mrb[0].mxu0 %v657
    %v1132 = vpop.f32.mrb[0].mxu0
    %v1133 = vadd.f32 0.0, %v1132
    %v1134 = vpop.f32.mrb[0].mxu0
    %1135 = vmatprep.mubr.f32.mxu0 0.0
    %1136 = vmatmul.mubr.f32.gmra.mrb[0].mxu0 %v660
    %v1137 = vpop.f32.mrb[0].mxu0
    %v1138 = vadd.f32 0.0, %v1137
    %v1139 = vpop.f32.mrb[0].mxu0
    %1140 = vmatprep.mubr.f32.mxu0 0.0
    %1141 = vmatmul.mubr.f32.gmra.mrb[0].mxu0 %v663
    %v1142 = vpop.f32.mrb[0].mxu0
    %v1143 = vadd.f32 0.0, %v1142
    %v1144 = vpop.f32.mrb[0].mxu0
    %1145 = vmatprep.mubr.f32.mxu0 0.0
    %1146 = vmatmul.mubr.f32.gmra.mrb[0].mxu0 %v666
    %v1147 = vpop.f32.mrb[0].mxu0
    %v1148 = vadd.f32 0.0, %v1147
    %v1149 = vpop.f32.mrb[0].mxu0
    %1150 = vmatprep.mubr.f32.mxu0 0.0
    %1151 = vmatmul.mubr.f32.gmra.mrb[0].mxu0 %v669
    %v1152 = vpop.f32.mrb[0].mxu0
    %v1153 = vadd.f32 0.0, %v1152
    %v1154 = vpop.f32.mrb[0].mxu0
    %1155 = vmatprep.mubr.f32.mxu0 0.0
    %1156 = vmatmul.mubr.f32.gmra.mrb[0].mxu0 %v672
    %v1157 = vpop.f32.mrb[0].mxu0
    %v1158 = vadd.f32 0.0, %v1157
    %v1159 = vpop.f32.mrb[0].mxu0
    %1160 = vmatprep.mubr.f32.mxu0 0.0
    %1161 = vmatmul.mubr.f32.gmra.mrb[0].mxu0 %v675
    %v1162 = vpop.f32.mrb[0].mxu0
    %v1163 = vadd.f32 0.0, %v1162
    %v1164 = vpop.f32.mrb[0].mxu0
    %1165 = vmatprep.mubr.f32.mxu0 0.0
    %1166 = vmatmul.mubr.f32.gmra.mrb[0].mxu0 %v678
    %v1167 = vpop.f32.mrb[0].mxu0
    %v1168 = vadd.f32 0.0, %v1167
    %v1169 = vpop.f32.mrb[0].mxu0
    %1170 = vdwg.mxu0
    %v1171 = vmul.f32 %v1133, %v506
    %v1172 = vmul.f32 %v1138, %v508
    %v1173 = vmul.f32 %v1143, %v510
    %v1174 = vmul.f32 %v1148, %v512
    %v1175 = vmul.f32 %v1153, %v514
    %v1176 = vmul.f32 %v1158, %v516
    %v1177 = vmul.f32 %v1163, %v518
    %v1178 = vmul.f32 %v1168, %v520
    %v1179 = vld [vmem:[#allocation15] sm:$0xff]
    %v1180 = vld [vmem:[#allocation15 + $0x8] sm:$0xff]
    %v1181 = vld [vmem:[#allocation15 + $0x10] sm:$0xff]
    %v1182 = vld [vmem:[#allocation15 + $0x18] sm:$0xff]
    %1183 = vmatprep.subr.mxu0 0.0
    %1184 = vmatpush1.msra.mxu0 %v1179
    %1185 = vmatprep.subr.mxu0 0.0
    %1186 = vmatpush1.msra.mxu0 %v1180
    %1187 = vmatprep.subr.mxu0 0.0
    %1188 = vmatpush1.msra.mxu0 %v1181
    %1189 = vmatprep.subr.mxu0 0.0
    %1190 = vmatpush1.msra.mxu0 %v1182
    %1191 = vmatprep.subr.mxu0 0.0
    %1192 = vmatpush1.msra.mxu0 0.0
    %1193 = vmatprep.subr.mxu0 0.0
    %1194 = vmatpush1.msra.mxu0 0.0
    %1195 = vmatprep.subr.mxu0 0.0
    %1196 = vmatpush1.msra.mxu0 0.0
    %1197 = vmatprep.subr.mxu0 0.0
    %1198 = vmatpush1.msra.mxu0 0.0
    %1199 = vmatprep.subr.mxu0 0.0
    %1200 = vmatpush1.msra.mxu0 0.0
    %1201 = vmatprep.subr.mxu0 0.0
    %1202 = vmatpush1.msra.mxu0 0.0
    %1203 = vmatprep.subr.mxu0 0.0
    %1204 = vmatpush1.msra.mxu0 0.0
    %1205 = vmatprep.subr.mxu0 0.0
    %1206 = vmatpush1.msra.mxu0 0.0
    %1207 = vmatprep.subr.mxu0 0.0
    %1208 = vmatpush1.msra.mxu0 0.0
    %1209 = vmatprep.subr.mxu0 0.0
    %1210 = vmatpush1.msra.mxu0 0.0
    %1211 = vmatprep.subr.mxu0 0.0
    %1212 = vmatpush1.msra.mxu0 0.0
    %1213 = vmatprep.subr.mxu0 0.0
    %1214 = vmatpush1.msra.mxu0 0.0
    %1215 = vmatprep.subr.mxu0 0.0
    %1216 = vmatpush1.msra.mxu0 0.0
    %1217 = vmatprep.subr.mxu0 0.0
    %1218 = vmatpush1.msra.mxu0 0.0
    %1219 = vmatprep.subr.mxu0 0.0
    %1220 = vmatpush1.msra.mxu0 0.0
    %1221 = vmatprep.subr.mxu0 0.0
    %1222 = vmatpush1.msra.mxu0 0.0
    %1223 = vmatprep.subr.mxu0 0.0
    %1224 = vmatpush1.msra.mxu0 0.0
    %1225 = vmatprep.subr.mxu0 0.0
    %1226 = vmatpush1.msra.mxu0 0.0
    %1227 = vmatprep.subr.mxu0 0.0
    %1228 = vmatpush1.msra.mxu0 0.0
    %1229 = vmatprep.subr.mxu0 0.0
    %1230 = vmatpush1.msra.mxu0 0.0
    %1231 = vmatprep.subr.mxu0 0.0
    %1232 = vmatpush1.msra.mxu0 0.0
    %1233 = vmatprep.subr.mxu0 0.0
    %1234 = vmatpush1.msra.mxu0 0.0
    %1235 = vmatprep.subr.mxu0 0.0
    %1236 = vmatpush1.msra.mxu0 0.0
    %1237 = vmatprep.subr.mxu0 0.0
    %1238 = vmatpush1.msra.mxu0 0.0
    %1239 = vmatprep.subr.mxu0 0.0
    %1240 = vmatpush1.msra.mxu0 0.0
    %1241 = vmatprep.subr.mxu0 0.0
    %1242 = vmatpush1.msra.mxu0 0.0
    %1243 = vmatprep.subr.mxu0 0.0
    %1244 = vmatpush1.msra.mxu0 0.0
    %1245 = vmatprep.subr.mxu0 0.0
    %1246 = vmatpush1.msra.mxu0 0.0
    %1247 = vmatprep.mubr.f32.mxu0 0.0
    %1248 = vmatmul.mubr.f32.gmra.mrb[0].mxu0 %v938
    %v1249 = vpop.f32.mrb[0].mxu0
    %v1250 = vadd.f32 0.0, %v1249
    %v1251 = vpop.f32.mrb[0].mxu0
    %1252 = vmatprep.mubr.f32.mxu0 0.0
    %1253 = vmatmul.mubr.f32.gmra.mrb[0].mxu0 %v941
    %v1254 = vpop.f32.mrb[0].mxu0
    %v1255 = vadd.f32 0.0, %v1254
    %v1256 = vpop.f32.mrb[0].mxu0
    %1257 = vmatprep.mubr.f32.mxu0 0.0
    %1258 = vmatmul.mubr.f32.gmra.mrb[0].mxu0 %v944
    %v1259 = vpop.f32.mrb[0].mxu0
    %v1260 = vadd.f32 0.0, %v1259
    %v1261 = vpop.f32.mrb[0].mxu0
    %1262 = vmatprep.mubr.f32.mxu0 0.0
    %1263 = vmatmul.mubr.f32.gmra.mrb[0].mxu0 %v947
    %v1264 = vpop.f32.mrb[0].mxu0
    %v1265 = vadd.f32 0.0, %v1264
    %v1266 = vpop.f32.mrb[0].mxu0
    %1267 = vmatprep.mubr.f32.mxu0 0.0
    %1268 = vmatmul.mubr.f32.gmra.mrb[0].mxu0 %v950
    %v1269 = vpop.f32.mrb[0].mxu0
    %v1270 = vadd.f32 0.0, %v1269
    %v1271 = vpop.f32.mrb[0].mxu0
    %1272 = vmatprep.mubr.f32.mxu0 0.0
    %1273 = vmatmul.mubr.f32.gmra.mrb[0].mxu0 %v953
    %v1274 = vpop.f32.mrb[0].mxu0
    %v1275 = vadd.f32 0.0, %v1274
    %v1276 = vpop.f32.mrb[0].mxu0
    %1277 = vmatprep.mubr.f32.mxu0 0.0
    %1278 = vmatmul.mubr.f32.gmra.mrb[0].mxu0 %v956
    %v1279 = vpop.f32.mrb[0].mxu0
    %v1280 = vadd.f32 0.0, %v1279
    %v1281 = vpop.f32.mrb[0].mxu0
    %1282 = vmatprep.mubr.f32.mxu0 0.0
    %1283 = vmatmul.mubr.f32.gmra.mrb[0].mxu0 %v959
    %v1284 = vpop.f32.mrb[0].mxu0
    %v1285 = vadd.f32 0.0, %v1284
    %v1286 = vpop.f32.mrb[0].mxu0
    %1287 = vdwg.mxu0
    %v1288 = vadd.f32 %v1171, %v1250
    %v1289 = vadd.f32 %v1172, %v1255
    %v1290 = vadd.f32 %v1173, %v1260
    %v1291 = vadd.f32 %v1174, %v1265
    %v1292 = vadd.f32 %v1175, %v1270
    %v1293 = vadd.f32 %v1176, %v1275
    %v1294 = vadd.f32 %v1177, %v1280
    %v1295 = vadd.f32 %v1178, %v1285
    %v1296 = vld [vmem:[#allocation17] sm:$0x1]
    %v1298 = vlaneseq
    %v1299 = vshrl.u32 %v1298, 7
    %v1300 = vsub.s32 0, %v1299
    %v1301 = vrot.slane %v1296, %v1300
    %v1303 = vadd.f32 %v1288, %v1301
    %v1304 = vadd.f32 %v1289, %v1301
    %v1305 = vadd.f32 %v1290, %v1301
    %v1306 = vadd.f32 %v1291, %v1301
    %v1307 = vadd.f32 %v1292, %v1301
    %v1308 = vadd.f32 %v1293, %v1301
    %v1309 = vadd.f32 %v1294, %v1301
    %v1310 = vadd.f32 %v1295, %v1301
    %v1311 = vld [vmem:[#allocation18] sm:$0xff]
    %v1312 = vld [vmem:[#allocation18 + $0x8] sm:$0xff]
    %v1313 = vld [vmem:[#allocation18 + $0x10] sm:$0xff]
    %v1314 = vld [vmem:[#allocation18 + $0x18] sm:$0xff]
    %v1316 = vsel %vm525, %v1303, 0
    %v1319 = vsel %vm525, %v1304, 0
    %v1322 = vsel %vm525, %v1305, 0
    %v1325 = vsel %vm525, %v1306, 0
    %v1328 = vsel %vm525, %v1307, 0
    %v1331 = vsel %vm525, %v1308, 0
    %v1334 = vsel %vm525, %v1309, 0
    %v1337 = vsel %vm525, %v1310, 0
    %1339 = vmatprep.subr.mxu0 0.0
    %1340 = vmatpush1.msra.mxu0 %v1311
    %1341 = vmatprep.subr.mxu0 0.0
    %1342 = vmatpush1.msra.mxu0 %v1312
    %1343 = vmatprep.subr.mxu0 0.0
    %1344 = vmatpush1.msra.mxu0 %v1313
    %1345 = vmatprep.subr.mxu0 0.0
    %1346 = vmatpush1.msra.mxu0 %v1314
    %1347 = vmatprep.subr.mxu0 0.0
    %1348 = vmatpush1.msra.mxu0 0.0
    %1349 = vmatprep.subr.mxu0 0.0
    %1350 = vmatpush1.msra.mxu0 0.0
    %1351 = vmatprep.subr.mxu0 0.0
    %1352 = vmatpush1.msra.mxu0 0.0
    %1353 = vmatprep.subr.mxu0 0.0
    %1354 = vmatpush1.msra.mxu0 0.0
    %1355 = vmatprep.subr.mxu0 0.0
    %1356 = vmatpush1.msra.mxu0 0.0
    %1357 = vmatprep.subr.mxu0 0.0
    %1358 = vmatpush1.msra.mxu0 0.0
    %1359 = vmatprep.subr.mxu0 0.0
    %1360 = vmatpush1.msra.mxu0 0.0
    %1361 = vmatprep.subr.mxu0 0.0
    %1362 = vmatpush1.msra.mxu0 0.0
    %1363 = vmatprep.subr.mxu0 0.0
    %1364 = vmatpush1.msra.mxu0 0.0
    %1365 = vmatprep.subr.mxu0 0.0
    %1366 = vmatpush1.msra.mxu0 0.0
    %1367 = vmatprep.subr.mxu0 0.0
    %1368 = vmatpush1.msra.mxu0 0.0
    %1369 = vmatprep.subr.mxu0 0.0
    %1370 = vmatpush1.msra.mxu0 0.0
    %1371 = vmatprep.subr.mxu0 0.0
    %1372 = vmatpush1.msra.mxu0 0.0
    %1373 = vmatprep.subr.mxu0 0.0
    %1374 = vmatpush1.msra.mxu0 0.0
    %1375 = vmatprep.subr.mxu0 0.0
    %1376 = vmatpush1.msra.mxu0 0.0
    %1377 = vmatprep.subr.mxu0 0.0
    %1378 = vmatpush1.msra.mxu0 0.0
    %1379 = vmatprep.subr.mxu0 0.0
    %1380 = vmatpush1.msra.mxu0 0.0
    %1381 = vmatprep.subr.mxu0 0.0
    %1382 = vmatpush1.msra.mxu0 0.0
    %1383 = vmatprep.subr.mxu0 0.0
    %1384 = vmatpush1.msra.mxu0 0.0
    %1385 = vmatprep.subr.mxu0 0.0
    %1386 = vmatpush1.msra.mxu0 0.0
    %1387 = vmatprep.subr.mxu0 0.0
    %1388 = vmatpush1.msra.mxu0 0.0
    %1389 = vmatprep.subr.mxu0 0.0
    %1390 = vmatpush1.msra.mxu0 0.0
    %1391 = vmatprep.subr.mxu0 0.0
    %1392 = vmatpush1.msra.mxu0 0.0
    %1393 = vmatprep.subr.mxu0 0.0
    %1394 = vmatpush1.msra.mxu0 0.0
    %1395 = vmatprep.subr.mxu0 0.0
    %1396 = vmatpush1.msra.mxu0 0.0
    %1397 = vmatprep.subr.mxu0 0.0
    %1398 = vmatpush1.msra.mxu0 0.0
    %1399 = vmatprep.subr.mxu0 0.0
    %1400 = vmatpush1.msra.mxu0 0.0
    %1401 = vmatprep.subr.mxu0 0.0
    %1402 = vmatpush1.msra.mxu0 0.0
    %1403 = vmatprep.mubr.f32.mxu0 0.0
    %1404 = vmatmul.mubr.f32.gmra.mrb[0].mxu0 %v1316
    %v1405 = vpop.f32.mrb[0].mxu0
    %v1406 = vadd.f32 0.0, %v1405
    %v1407 = vpop.f32.mrb[0].mxu0
    %1408 = vmatprep.mubr.f32.mxu0 0.0
    %1409 = vmatmul.mubr.f32.gmra.mrb[0].mxu0 %v1319
    %v1410 = vpop.f32.mrb[0].mxu0
    %v1411 = vadd.f32 0.0, %v1410
    %v1412 = vpop.f32.mrb[0].mxu0
    %1413 = vmatprep.mubr.f32.mxu0 0.0
    %1414 = vmatmul.mubr.f32.gmra.mrb[0].mxu0 %v1322
    %v1415 = vpop.f32.mrb[0].mxu0
    %v1416 = vadd.f32 0.0, %v1415
    %v1417 = vpop.f32.mrb[0].mxu0
    %1418 = vmatprep.mubr.f32.mxu0 0.0
    %1419 = vmatmul.mubr.f32.gmra.mrb[0].mxu0 %v1325
    %v1420 = vpop.f32.mrb[0].mxu0
    %v1421 = vadd.f32 0.0, %v1420
    %v1422 = vpop.f32.mrb[0].mxu0
    %1423 = vmatprep.mubr.f32.mxu0 0.0
    %1424 = vmatmul.mubr.f32.gmra.mrb[0].mxu0 %v1328
    %v1425 = vpop.f32.mrb[0].mxu0
    %v1426 = vadd.f32 0.0, %v1425
    %v1427 = vpop.f32.mrb[0].mxu0
    %1428 = vmatprep.mubr.f32.mxu0 0.0
    %1429 = vmatmul.mubr.f32.gmra.mrb[0].mxu0 %v1331
    %v1430 = vpop.f32.mrb[0].mxu0
    %v1431 = vadd.f32 0.0, %v1430
    %v1432 = vpop.f32.mrb[0].mxu0
    %1433 = vmatprep.mubr.f32.mxu0 0.0
    %1434 = vmatmul.mubr.f32.gmra.mrb[0].mxu0 %v1334
    %v1435 = vpop.f32.mrb[0].mxu0
    %v1436 = vadd.f32 0.0, %v1435
    %v1437 = vpop.f32.mrb[0].mxu0
    %1438 = vmatprep.mubr.f32.mxu0 0.0
    %1439 = vmatmul.mubr.f32.gmra.mrb[0].mxu0 %v1337
    %v1440 = vpop.f32.mrb[0].mxu0
    %v1441 = vadd.f32 0.0, %v1440
    %v1442 = vpop.f32.mrb[0].mxu0
    %1443 = vdwg.mxu0
    %v1444 = vld [vmem:[#allocation20] sm:$0xff]
    %v1445 = vld [vmem:[#allocation20 + $0x8] sm:$0xff]
    %v1446 = vld [vmem:[#allocation20 + $0x10] sm:$0xff]
    %v1447 = vld [vmem:[#allocation20 + $0x18] sm:$0xff]
    %1448 = vmatprep.subr.mxu0 0.0
    %1449 = vmatpush1.msra.mxu0 %v1444
    %1450 = vmatprep.subr.mxu0 0.0
    %1451 = vmatpush1.msra.mxu0 %v1445
    %1452 = vmatprep.subr.mxu0 0.0
    %1453 = vmatpush1.msra.mxu0 %v1446
    %1454 = vmatprep.subr.mxu0 0.0
    %1455 = vmatpush1.msra.mxu0 %v1447
    %1456 = vmatprep.subr.mxu0 0.0
    %1457 = vmatpush1.msra.mxu0 0.0
    %1458 = vmatprep.subr.mxu0 0.0
    %1459 = vmatpush1.msra.mxu0 0.0
    %1460 = vmatprep.subr.mxu0 0.0
    %1461 = vmatpush1.msra.mxu0 0.0
    %1462 = vmatprep.subr.mxu0 0.0
    %1463 = vmatpush1.msra.mxu0 0.0
    %1464 = vmatprep.subr.mxu0 0.0
    %1465 = vmatpush1.msra.mxu0 0.0
    %1466 = vmatprep.subr.mxu0 0.0
    %1467 = vmatpush1.msra.mxu0 0.0
    %1468 = vmatprep.subr.mxu0 0.0
    %1469 = vmatpush1.msra.mxu0 0.0
    %1470 = vmatprep.subr.mxu0 0.0
    %1471 = vmatpush1.msra.mxu0 0.0
    %1472 = vmatprep.subr.mxu0 0.0
    %1473 = vmatpush1.msra.mxu0 0.0
    %1474 = vmatprep.subr.mxu0 0.0
    %1475 = vmatpush1.msra.mxu0 0.0
    %1476 = vmatprep.subr.mxu0 0.0
    %1477 = vmatpush1.msra.mxu0 0.0
    %1478 = vmatprep.subr.mxu0 0.0
    %1479 = vmatpush1.msra.mxu0 0.0
    %1480 = vmatprep.subr.mxu0 0.0
    %1481 = vmatpush1.msra.mxu0 0.0
    %1482 = vmatprep.subr.mxu0 0.0
    %1483 = vmatpush1.msra.mxu0 0.0
    %1484 = vmatprep.subr.mxu0 0.0
    %1485 = vmatpush1.msra.mxu0 0.0
    %1486 = vmatprep.subr.mxu0 0.0
    %1487 = vmatpush1.msra.mxu0 0.0
    %1488 = vmatprep.subr.mxu0 0.0
    %1489 = vmatpush1.msra.mxu0 0.0
    %1490 = vmatprep.subr.mxu0 0.0
    %1491 = vmatpush1.msra.mxu0 0.0
    %1492 = vmatprep.subr.mxu0 0.0
    %1493 = vmatpush1.msra.mxu0 0.0
    %1494 = vmatprep.subr.mxu0 0.0
    %1495 = vmatpush1.msra.mxu0 0.0
    %1496 = vmatprep.subr.mxu0 0.0
    %1497 = vmatpush1.msra.mxu0 0.0
    %1498 = vmatprep.subr.mxu0 0.0
    %1499 = vmatpush1.msra.mxu0 0.0
    %1500 = vmatprep.subr.mxu0 0.0
    %1501 = vmatpush1.msra.mxu0 0.0
    %1502 = vmatprep.subr.mxu0 0.0
    %1503 = vmatpush1.msra.mxu0 0.0
    %1504 = vmatprep.subr.mxu0 0.0
    %1505 = vmatpush1.msra.mxu0 0.0
    %1506 = vmatprep.subr.mxu0 0.0
    %1507 = vmatpush1.msra.mxu0 0.0
    %1508 = vmatprep.subr.mxu0 0.0
    %1509 = vmatpush1.msra.mxu0 0.0
    %1510 = vmatprep.subr.mxu0 0.0
    %1511 = vmatpush1.msra.mxu0 0.0
    %1512 = vmatprep.mubr.f32.mxu0 0.0
    %1513 = vmatmul.mubr.f32.gmra.mrb[0].mxu0 %v1316
    %v1514 = vpop.f32.mrb[0].mxu0
    %v1515 = vadd.f32 0.0, %v1514
    %v1516 = vpop.f32.mrb[0].mxu0
    %1517 = vmatprep.mubr.f32.mxu0 0.0
    %1518 = vmatmul.mubr.f32.gmra.mrb[0].mxu0 %v1319
    %v1519 = vpop.f32.mrb[0].mxu0
    %v1520 = vadd.f32 0.0, %v1519
    %v1521 = vpop.f32.mrb[0].mxu0
    %1522 = vmatprep.mubr.f32.mxu0 0.0
    %1523 = vmatmul.mubr.f32.gmra.mrb[0].mxu0 %v1322
    %v1524 = vpop.f32.mrb[0].mxu0
    %v1525 = vadd.f32 0.0, %v1524
    %v1526 = vpop.f32.mrb[0].mxu0
    %1527 = vmatprep.mubr.f32.mxu0 0.0
    %1528 = vmatmul.mubr.f32.gmra.mrb[0].mxu0 %v1325
    %v1529 = vpop.f32.mrb[0].mxu0
    %v1530 = vadd.f32 0.0, %v1529
    %v1531 = vpop.f32.mrb[0].mxu0
    %1532 = vmatprep.mubr.f32.mxu0 0.0
    %1533 = vmatmul.mubr.f32.gmra.mrb[0].mxu0 %v1328
    %v1534 = vpop.f32.mrb[0].mxu0
    %v1535 = vadd.f32 0.0, %v1534
    %v1536 = vpop.f32.mrb[0].mxu0
    %1537 = vmatprep.mubr.f32.mxu0 0.0
    %1538 = vmatmul.mubr.f32.gmra.mrb[0].mxu0 %v1331
    %v1539 = vpop.f32.mrb[0].mxu0
    %v1540 = vadd.f32 0.0, %v1539
    %v1541 = vpop.f32.mrb[0].mxu0
    %1542 = vmatprep.mubr.f32.mxu0 0.0
    %1543 = vmatmul.mubr.f32.gmra.mrb[0].mxu0 %v1334
    %v1544 = vpop.f32.mrb[0].mxu0
    %v1545 = vadd.f32 0.0, %v1544
    %v1546 = vpop.f32.mrb[0].mxu0
    %1547 = vmatprep.mubr.f32.mxu0 0.0
    %1548 = vmatmul.mubr.f32.gmra.mrb[0].mxu0 %v1337
    %v1549 = vpop.f32.mrb[0].mxu0
    %v1550 = vadd.f32 0.0, %v1549
    %v1551 = vpop.f32.mrb[0].mxu0
    %1552 = vdwg.mxu0
    %v1553 = vld [vmem:[#allocation21] sm:$0x1]
    %v1554 = vlaneseq
    %v1555 = vshrl.u32 %v1554, 7
    %v1556 = vsub.s32 0, %v1555
    %v1557 = vrot.slane %v1553, %v1556
    %vm1558 = vcmp.eq.s32.totalorder %v225, %v1557
    %vm1559 = vcmp.eq.s32.totalorder %v226, %v1557
    %vm1560 = vcmp.eq.s32.totalorder %v227, %v1557
    %vm1561 = vcmp.eq.s32.totalorder %v228, %v1557
    %vm1562 = vcmp.eq.s32.totalorder %v229, %v1557
    %vm1563 = vcmp.eq.s32.totalorder %v230, %v1557
    %vm1564 = vcmp.eq.s32.totalorder %v231, %v1557
    %vm1565 = vcmp.eq.s32.totalorder %v232, %v1557
    %v1566 = vsel %vm1558, 1, 0
    %v1567 = vsel %vm1559, 1, 0
    %v1568 = vsel %vm1560, 1, 0
    %v1569 = vsel %vm1561, 1, 0
    %v1570 = vsel %vm1562, 1, 0
    %v1571 = vsel %vm1563, 1, 0
    %v1572 = vsel %vm1564, 1, 0
    %v1573 = vsel %vm1565, 1, 0
    %v1574 = vcvt.s32.f32 %v1566
    %v1575 = vcvt.s32.f32 %v1567
    %v1576 = vcvt.s32.f32 %v1568
    %v1577 = vcvt.s32.f32 %v1569
    %v1578 = vcvt.s32.f32 %v1570
    %v1579 = vcvt.s32.f32 %v1571
    %v1580 = vcvt.s32.f32 %v1572
    %v1581 = vcvt.s32.f32 %v1573
    %v1582 = vld [vmem:[#allocation23] sm:$0x1]
    %v1583 = vlaneseq
    %v1584 = vshrl.u32 %v1583, 7
    %v1585 = vsub.s32 0, %v1584
    %v1586 = vrot.slane %v1582, %v1585
    %vm1587 = vcmp.eq.s32.totalorder %v225, %v1586
    %vm1588 = vcmp.eq.s32.totalorder %v226, %v1586
    %vm1589 = vcmp.eq.s32.totalorder %v227, %v1586
    %vm1590 = vcmp.eq.s32.totalorder %v228, %v1586
    %vm1591 = vcmp.eq.s32.totalorder %v229, %v1586
    %vm1592 = vcmp.eq.s32.totalorder %v230, %v1586
    %vm1593 = vcmp.eq.s32.totalorder %v231, %v1586
    %vm1594 = vcmp.eq.s32.totalorder %v232, %v1586
    %v1595 = vsel %vm1587, 1, 0
    %v1596 = vsel %vm1588, 1, 0
    %v1597 = vsel %vm1589, 1, 0
    %v1598 = vsel %vm1590, 1, 0
    %v1599 = vsel %vm1591, 1, 0
    %v1600 = vsel %vm1592, 1, 0
    %v1601 = vsel %vm1593, 1, 0
    %v1602 = vsel %vm1594, 1, 0
    %v1603 = vcvt.s32.f32 %v1595
    %v1604 = vcvt.s32.f32 %v1596
    %v1605 = vcvt.s32.f32 %v1597
    %v1606 = vcvt.s32.f32 %v1598
    %v1607 = vcvt.s32.f32 %v1599
    %v1608 = vcvt.s32.f32 %v1600
    %v1609 = vcvt.s32.f32 %v1601
    %v1610 = vcvt.s32.f32 %v1602
    %1612 = vset.pattern.permute.xlu0 0
    %1613 = vperm.xlu0 %1612, %v1406
    %v1614 = vpop.permute.xlu0 %1613
    %1617 = vset.pattern.permute.xlu0 0
    %1618 = vperm.xlu0 %1617, %v1411
    %v1619 = vpop.permute.xlu0 %1618
    %1622 = vset.pattern.permute.xlu0 0
    %1623 = vperm.xlu0 %1622, %v1416
    %v1624 = vpop.permute.xlu0 %1623
    %1627 = vset.pattern.permute.xlu0 0
    %1628 = vperm.xlu0 %1627, %v1421
    %v1629 = vpop.permute.xlu0 %1628
    %1632 = vset.pattern.permute.xlu0 0
    %1633 = vperm.xlu0 %1632, %v1426
    %v1634 = vpop.permute.xlu0 %1633
    %1637 = vset.pattern.permute.xlu0 0
    %1638 = vperm.xlu0 %1637, %v1431
    %v1639 = vpop.permute.xlu0 %1638
    %1642 = vset.pattern.permute.xlu0 0
    %1643 = vperm.xlu0 %1642, %v1436
    %v1644 = vpop.permute.xlu0 %1643
    %1647 = vset.pattern.permute.xlu0 0
    %1648 = vperm.xlu0 %1647, %v1441
    %v1649 = vpop.permute.xlu0 %1648
    %v1651 = vmul.f32 %v1614, %v1574
    %v1652 = vmul.f32 %v1619, %v1575
    %v1653 = vmul.f32 %v1624, %v1576
    %v1654 = vmul.f32 %v1629, %v1577
    %v1655 = vmul.f32 %v1634, %v1578
    %v1656 = vmul.f32 %v1639, %v1579
    %v1657 = vmul.f32 %v1644, %v1580
    %v1658 = vmul.f32 %v1649, %v1581
    %1660 = vset.pattern.permute.xlu0 0
    %1661 = vperm.xlu0 %1660, %v1515
    %v1662 = vpop.permute.xlu0 %1661
    %1665 = vset.pattern.permute.xlu0 0
    %1666 = vperm.xlu0 %1665, %v1520
    %v1667 = vpop.permute.xlu0 %1666
    %1670 = vset.pattern.permute.xlu0 0
    %1671 = vperm.xlu0 %1670, %v1525
    %v1672 = vpop.permute.xlu0 %1671
    %1675 = vset.pattern.permute.xlu0 0
    %1676 = vperm.xlu0 %1675, %v1530
    %v1677 = vpop.permute.xlu0 %1676
    %1680 = vset.pattern.permute.xlu0 0
    %1681 = vperm.xlu0 %1680, %v1535
    %v1682 = vpop.permute.xlu0 %1681
    %1685 = vset.pattern.permute.xlu0 0
    %1686 = vperm.xlu0 %1685, %v1540
    %v1687 = vpop.permute.xlu0 %1686
    %1690 = vset.pattern.permute.xlu0 0
    %1691 = vperm.xlu0 %1690, %v1545
    %v1692 = vpop.permute.xlu0 %1691
    %1695 = vset.pattern.permute.xlu0 0
    %1696 = vperm.xlu0 %1695, %v1550
    %v1697 = vpop.permute.xlu0 %1696
    %v1699 = vmul.f32 %v1662, %v1603
    %v1700 = vmul.f32 %v1667, %v1604
    %v1701 = vmul.f32 %v1672, %v1605
    %v1702 = vmul.f32 %v1677, %v1606
    %v1703 = vmul.f32 %v1682, %v1607
    %v1704 = vmul.f32 %v1687, %v1608
    %v1705 = vmul.f32 %v1692, %v1609
    %v1706 = vmul.f32 %v1697, %v1610
    %v1707 = vadd.f32 %v1651, %v1699
    %v1708 = vadd.f32 %v1652, %v1700
    %v1709 = vadd.f32 %v1653, %v1701
    %v1710 = vadd.f32 %v1654, %v1702
    %v1711 = vadd.f32 %v1655, %v1703
    %v1712 = vadd.f32 %v1656, %v1704
    %v1713 = vadd.f32 %v1657, %v1705
    %v1714 = vadd.f32 %v1658, %v1706
    %v1715 = vadd.f32 %v1707, %v1708
    %v1716 = vadd.f32 %v1715, %v1709
    %v1717 = vadd.f32 %v1716, %v1710
    %v1718 = vadd.f32 %v1717, %v1711
    %v1719 = vadd.f32 %v1718, %v1712
    %v1720 = vadd.f32 %v1719, %v1713
    %v1721 = vadd.f32 %v1720, %v1714
    %v1722 = vrot.slane %v1721, 4
    %v1723 = vadd.f32 %v1721, %v1722
    %v1724 = vrot.slane %v1723, 2
    %v1725 = vadd.f32 %v1723, %v1724
    %v1726 = vrot.slane %v1725, 1
    %v1727 = vadd.f32 %v1725, %v1726
    %v1728 = vld [vmem:[#allocation2] sm:$0x1]
    %1730 = vset.pattern.permute.xlu0 0
    %1731 = vperm.xlu0 %1730, %v1728
    %v1732 = vpop.permute.xlu0 %1731
    %v1734 = vlaneseq
    %v1735 = vshrl.u32 %v1734, 7
    %v1736 = vsub.s32 0, %v1735
    %v1737 = vrot.slane %v1732, %v1736
    %v1738 = vadd.f32 %v1727, %v1737
    %1739 = vst [vmem:[#allocation24] sm:$0x1] %v1738
    // Predicated region
    $region110: #{tpu_custom_call.1} parent=1 // pred_check
      _
    $region111: #{tpu_custom_call.1} parent=1 // pred_check_branch
      %1741 = sbr.rel (0) target = $region113
    $region112: #{tpu_custom_call.1} parent=1 // pred_region
      %s1743 = ssub.s32 16, 16
      %1744 = vsyncadd [#allocation5], %s1743
      %s1746 = sshll.u32 [#allocation24], 4
      %s1747 = int_to_ptr.vmem [resolvable:$true] %s1746
      %1749 = dma.vmem_to_hbm [thread:$0]  %s1747, 16, %s14, [#allocation5]
    $region113: #{tpu_custom_call.1} parent=1 // pred_fallthru
      _
    // Predicated region
    $region114: #{tpu_custom_call.1} parent=1 // pred_check
      _
    $region115: #{tpu_custom_call.1} parent=1 // pred_check_branch
      %1751 = sbr.rel (0) target = $region117
    $region116: #{tpu_custom_call.1} parent=1 // pred_region
      %1752 = dma.done [#allocation5], 16
    $region117: #{tpu_custom_call.1} parent=1 // pred_fallthru
      _
    %1753 = vsyncpa [#allocation4], 1
    %1754 = vsyncpa [#allocation7], 1
    %1755 = vsyncpa [#allocation10], 1
    %1756 = vsyncpa [#allocation13], 1
    %1757 = vsyncpa [#allocation16], 1
    %1758 = vsyncpa [#allocation19], 1
    %1759 = vsyncpa [#allocation22], 1
    %1760 = vsyncpa [#allocation5], 1

</llo_original>
